<compile_context>
chip_gen: v7x
topology: tpu7x:2x2x1
jax: 0.10.0
libtpu: 0.0.40
codegen_flags: <defaults>
</compile_context>

<pallas_src>
import functools

import jax
import jax.numpy as jnp
from jax.experimental import pallas as pl
from jax.experimental.pallas import tpu as pltpu

Q = 3.0


def _round_up(x, m):
    return ((x + m - 1) // m) * m


def siamese_loss_kernel(f1_ref, f2_ref, y_ref, o_ref, acc_ref, *,
                        n_valid, tile_n, n_tiles):
    p = pl.program_id(0)
    i = pl.program_id(1)

    @pl.when(i == 0)
    def _init():
        acc_ref[...] = jnp.zeros_like(acc_ref)

    # (D, tile_n) feature blocks; upcast in-kernel so bf16 streams at half HBM.
    f1 = f1_ref[...].astype(jnp.float32)
    f2 = f2_ref[...].astype(jnp.float32)
    diff = f1 - f2
    # Sublane reduce over D -> lane-dense (1, tile_n) squared distances.
    d2 = jnp.sum(diff * diff, axis=0, keepdims=True)
    d = jnp.sqrt(d2)                        # EUP, lane-dense
    yv = y_ref[...]                         # (1, tile_n) lane-dense
    a = (1.0 - yv) * (2.0 / Q) * d2         # uses d^2 directly (no sqrt round-trip)
    b = yv * (2.0 * Q) * jnp.exp((-2.77 / Q) * d)
    contrib = a + b

    # Mask the ragged tail / fully-out-of-range (clamped) tiles: cols >= N -> 0.
    col0 = (p * n_tiles + i) * tile_n
    col = col0 + jax.lax.broadcasted_iota(jnp.int32, (1, tile_n), 1)
    contrib = jnp.where(col < n_valid, contrib, 0.0)

    # Lane-dense vector accumulation; single cross-lane reduce at finalize.
    acc_ref[...] += contrib

    @pl.when(i == pl.num_programs(1) - 1)
    def _finalize():
        total = jnp.sum(acc_ref[...])
        o_ref[...] = jnp.full(o_ref.shape, total, dtype=o_ref.dtype)


def siamese_loss(f1, f2, y, *, feature_major=False, num_parallel=2,
                 vmem_budget_bytes=24 << 20):
    """f1, f2: (N, D) float arrays (or (D, N) with feature_major=True);
    y: (N,) labels -> scalar float32 loss."""
    f1 = jnp.asarray(f1)
    f2 = jnp.asarray(f2)
    if not jnp.issubdtype(f1.dtype, jnp.floating):
        f1 = f1.astype(jnp.float32)
    if not jnp.issubdtype(f2.dtype, jnp.floating):
        f2 = f2.astype(jnp.float32)

    if feature_major:
        f1t, f2t = f1, f2
        D, N = f1t.shape
    else:
        N, D = f1.shape
        # One-time layout change so samples land on the 128-wide lane axis.
        # TODO(synk): callers that already hold features as (D, N) should pass
        # feature_major=True and skip this extra HBM pass.
        f1t, f2t = f1.T, f2.T

    y2 = jnp.asarray(y, jnp.float32).reshape(1, N)

    # ---- tile sizing (explicit VMEM budget, v7x-safe) ----------------------
    itemsize = jnp.dtype(f1t.dtype).itemsize
    sublane = max(8, 32 // itemsize)            # f32: 8, bf16: 16, int8: 32
    d_pad = _round_up(D, sublane)
    bytes_per_col = (2 * 2 * d_pad * itemsize   # f1, f2 blocks, double-buffered
                     + 2 * 8 * 4                # y (1, tile_n) f32, padded, 2 bufs
                     + 8 * 4)                   # acc scratch (1, tile_n) f32

    ALIGN = 512
    tile_cap = max(ALIGN, (vmem_budget_bytes // bytes_per_col) // ALIGN * ALIGN)
    tile_n = min(tile_cap, 65536, _round_up(N, ALIGN))

    n_blocks = pl.cdiv(N, tile_n)               # real blocks in the sample axis
    parts = num_parallel if (num_parallel >= 2 and
                             n_blocks >= 4 * num_parallel) else 1
    n_tiles = pl.cdiv(n_blocks, parts)
    last_block = n_blocks - 1                   # clamp target for phantom tiles

    footprint = bytes_per_col * tile_n
    vmem_limit = int(min(48 << 20, max(32 << 20, footprint + (8 << 20))))

    cost = pl.CostEstimate(
        flops=(3 * D + 12) * N,
        transcendentals=2 * N,
        bytes_accessed=2 * N * D * itemsize + N * 4 + parts * 8 * 128 * 4,
    )

    feat_spec = pl.BlockSpec(
        (D, tile_n), lambda p, i: (0, jnp.minimum(p * n_tiles + i, last_block)))
    y_spec = pl.BlockSpec(
        (1, tile_n), lambda p, i: (0, jnp.minimum(p * n_tiles + i, last_block)))

    out = pl.pallas_call(
        functools.partial(siamese_loss_kernel,
                          n_valid=N, tile_n=tile_n, n_tiles=n_tiles),
        out_shape=jax.ShapeDtypeStruct((parts, 8, 128), jnp.float32),
        grid_spec=pltpu.PrefetchScalarGridSpec(
            num_scalar_prefetch=0,
            grid=(parts, n_tiles),
            in_specs=[feat_spec, feat_spec, y_spec],
            out_specs=pl.BlockSpec((1, 8, 128), lambda p, i: (p, 0, 0)),
            scratch_shapes=[pltpu.VMEM((1, tile_n), jnp.float32)],
        ),
        compiler_params=pltpu.CompilerParams(
            dimension_semantics=("parallel", "arbitrary"),
            vmem_limit_bytes=vmem_limit,
        ),
        cost_estimate=cost,
    )(f1t, f2t, y2)

    # Each part's output tile is filled with its partial sum; one lane per part.
    return jnp.sum(out[:, 0, 0])


def siamese_loss_ref(f1, f2, y):
    """Pure-JAX reference for correctness checking."""
    d = jnp.sqrt(jnp.sum(jnp.abs(f1 - f2) ** 2, axis=1))
    a = (1.0 - y) * (2.0 / Q) * (d * d)
    b = y * (2.0 * Q * jnp.exp(-2.77 * d / Q))
    return jnp.sum(a + b)


if __name__ == "__main__":
    key = jax.random.PRNGKey(0)
    k1, k2, k3, k4, k5, k6 = jax.random.split(key, 6)

    # Small case matching the module's expected usage (batch=8, hidden=32).
    N, D = 8, 32
    f1 = jax.random.normal(k1, (N, D), dtype=jnp.float32)
    f2 = jax.random.normal(k2, (N, D), dtype=jnp.float32)
    y = jax.random.bernoulli(k3, 0.5, (N,)).astype(jnp.float32)

    loss = siamese_loss(f1, f2, y)
    jax.block_until_ready(loss)
    ref = siamese_loss_ref(f1, f2, y)
    assert jnp.allclose(loss, ref, rtol=1e-5, atol=1e-4), (loss, ref)

    # Moderate case, default budget: one large partial tile (big-tile path).
    N2, D2 = 4500, 32
    g1 = jax.random.normal(k4, (N2, D2), dtype=jnp.float32)
    g2 = jax.random.normal(k5, (N2, D2), dtype=jnp.float32)
    yl = jax.random.bernoulli(k6, 0.5, (N2,)).astype(jnp.float32)

    loss2 = siamese_loss(g1, g2, yl)
    jax.block_until_ready(loss2)
    ref2 = siamese_loss_ref(g1, g2, yl)
    assert jnp.allclose(loss2, ref2, rtol=1e-4, atol=1e-2), (loss2, ref2)

    # Same data with a tiny VMEM budget to force multi-tile accumulation, the
    # megacore parts split, the ragged tail and the clamped phantom tile
    # (tile_n=512 -> 9 real blocks, grid (2, 5)).
    loss3 = siamese_loss(g1, g2, yl, vmem_budget_bytes=320_000)
    jax.block_until_ready(loss3)
    assert jnp.allclose(loss3, ref2, rtol=1e-4, atol=1e-2), (loss3, ref2)

    print("KERNEL_OK")
</pallas_src>

<mosaic_0001>
module attributes {stable_mosaic.version = 11 : i64} {
  func.func @siamese_loss_kernel(%arg0: i32, %arg1: i32, %arg2: memref<32x512xf32, #tpu.memory_space<vmem>>, %arg3: memref<32x512xf32, #tpu.memory_space<vmem>>, %arg4: memref<1x512xf32, #tpu.memory_space<vmem>>, %arg5: memref<1x8x128xf32, #tpu.memory_space<vmem>>, %arg6: memref<1x512xf32, #tpu.memory_space<vmem>>) attributes {dimension_semantics = [#tpu.dimension_semantics<parallel>, #tpu.dimension_semantics<arbitrary>], iteration_bounds = array<i64: 1, 1>, scalar_prefetch = 0 : i64, scratch_operands = 1 : i64, tpu.core_type = #tpu.core_type<tc>, window_params = [{transform_indices = @transform_0, window_bounds = array<i64: 32, 512>}, {transform_indices = @transform_1, window_bounds = array<i64: 32, 512>}, {transform_indices = @transform_2, window_bounds = array<i64: 1, 512>}, {transform_indices = @transform_3, window_bounds = array<i64: 1, 8, 128>}]} {
    %c0_i32 = arith.constant 0 : i32
    %0 = arith.cmpi eq, %arg1, %c0_i32 : i32
    %1 = arith.extui %0 : i1 to i32
    %c0_i32_0 = arith.constant 0 : i32
    %2 = arith.cmpi ne, %1, %c0_i32_0 : i32
    scf.if %2 {
      %cst_17 = arith.constant 0.000000e+00 : f32
      %39 = vector.broadcast %cst_17 : f32 to vector<1x512xf32>
      %c0_18 = arith.constant 0 : index
      %c0_19 = arith.constant 0 : index
      %40 = vector.load %arg6[%c0_18, %c0_19] : memref<1x512xf32, #tpu.memory_space<vmem>>, vector<1x512xf32>
      tpu.vector_store %arg6[%c0_18, %c0_19], %39 {strides = array<i32>} : memref<1x512xf32, #tpu.memory_space<vmem>>, vector<1x512xf32>,
    } else {
    }
    %c0 = arith.constant 0 : index
    %c0_1 = arith.constant 0 : index
    %3 = vector.load %arg2[%c0, %c0_1] : memref<32x512xf32, #tpu.memory_space<vmem>>, vector<32x512xf32>
    %c0_2 = arith.constant 0 : index
    %c0_3 = arith.constant 0 : index
    %4 = vector.load %arg3[%c0_2, %c0_3] : memref<32x512xf32, #tpu.memory_space<vmem>>, vector<32x512xf32>
    %5 = arith.subf %3, %4 : vector<32x512xf32>
    %6 = arith.mulf %5, %5 : vector<32x512xf32>
    %cst = arith.constant dense<0.000000e+00> : vector<512xf32>
    %7 = vector.multi_reduction <add>, %6, %cst [0] : vector<32x512xf32> to vector<512xf32>
    %8 = vector.shape_cast %7 : vector<512xf32> to vector<1x512xf32>
    %9 = math.sqrt %8 : vector<1x512xf32>
    %c0_4 = arith.constant 0 : index
    %c0_5 = arith.constant 0 : index
    %10 = vector.load %arg4[%c0_4, %c0_5] : memref<1x512xf32, #tpu.memory_space<vmem>>, vector<1x512xf32>
    %cst_6 = arith.constant 1.000000e+00 : f32
    %11 = vector.broadcast %cst_6 : f32 to vector<1x512xf32>
    %12 = arith.subf %11, %10 : vector<1x512xf32>
    %cst_7 = arith.constant 0.666666686 : f32
    %13 = vector.broadcast %cst_7 : f32 to vector<1x512xf32>
    %14 = arith.mulf %12, %13 : vector<1x512xf32>
    %15 = arith.mulf %14, %8 : vector<1x512xf32>
    %cst_8 = arith.constant 6.000000e+00 : f32
    %16 = vector.broadcast %cst_8 : f32 to vector<1x512xf32>
    %17 = arith.mulf %10, %16 : vector<1x512xf32>
    %cst_9 = arith.constant -0.923333346 : f32
    %18 = vector.broadcast %cst_9 : f32 to vector<1x512xf32>
    %19 = arith.mulf %18, %9 : vector<1x512xf32>
    %20 = math.exp %19 : vector<1x512xf32>
    %21 = arith.mulf %17, %20 : vector<1x512xf32>
    %22 = arith.addf %15, %21 : vector<1x512xf32>
    %c1_i32 = arith.constant 1 : i32
    %23 = arith.muli %arg0, %c1_i32 : i32
    %24 = arith.addi %23, %arg1 : i32
    %c512_i32 = arith.constant 512 : i32
    %25 = arith.muli %24, %c512_i32 : i32
    %26 = tpu.iota {dimensions = array<i32: 1>} : vector<1x512xi32>
    %27 = vector.broadcast %25 : i32 to vector<1x512xi32>
    %28 = arith.addi %27, %26 : vector<1x512xi32>
    %c8_i32 = arith.constant 8 : i32
    %29 = vector.broadcast %c8_i32 : i32 to vector<1x512xi32>
    %30 = arith.cmpi slt, %28, %29 : vector<1x512xi32>
    %cst_10 = arith.constant 0.000000e+00 : f32
    %31 = vector.broadcast %cst_10 : f32 to vector<1x512xf32>
    %32 = arith.select %30, %22, %31 : vector<1x512xi1>, vector<1x512xf32>
    %c0_11 = arith.constant 0 : index
    %c0_12 = arith.constant 0 : index
    %33 = vector.load %arg6[%c0_11, %c0_12] : memref<1x512xf32, #tpu.memory_space<vmem>>, vector<1x512xf32>
    %34 = arith.addf %33, %32 : vector<1x512xf32>
    %c0_13 = arith.constant 0 : index
    %c0_14 = arith.constant 0 : index
    %35 = vector.load %arg6[%c0_13, %c0_14] : memref<1x512xf32, #tpu.memory_space<vmem>>, vector<1x512xf32>
    tpu.vector_store %arg6[%c0_13, %c0_14], %34 {strides = array<i32>} : memref<1x512xf32, #tpu.memory_space<vmem>>, vector<1x512xf32>,
    %c0_i32_15 = arith.constant 0 : i32
    %36 = arith.cmpi eq, %arg1, %c0_i32_15 : i32
    %37 = arith.extui %36 : i1 to i32
    %c0_i32_16 = arith.constant 0 : i32
    %38 = arith.cmpi ne, %37, %c0_i32_16 : i32
    scf.if %38 {
      %c0_17 = arith.constant 0 : index
      %c0_18 = arith.constant 0 : index
      %39 = vector.load %arg6[%c0_17, %c0_18] : memref<1x512xf32, #tpu.memory_space<vmem>>, vector<1x512xf32>
      %40 = vector.shape_cast %39 : vector<1x512xf32> to vector<1x1x512xf32>
      %cst_19 = arith.constant dense<0.000000e+00> : vector<1xf32>
      %41 = vector.multi_reduction <add>, %40, %cst_19 [1, 2] : vector<1x1x512xf32> to vector<1xf32>
      %42 = vector.shape_cast %41 : vector<1xf32> to vector<1x1x1xf32>
      %43 = vector.extract %42[0, 0, 0] : f32 from vector<1x1x1xf32>
      %44 = vector.broadcast %43 : f32 to vector<1x8x128xf32>
      %c0_20 = arith.constant 0 : index
      %c0_21 = arith.constant 0 : index
      %c0_22 = arith.constant 0 : index
      %45 = vector.load %arg5[%c0_20, %c0_21, %c0_22] : memref<1x8x128xf32, #tpu.memory_space<vmem>>, vector<1x8x128xf32>
      tpu.vector_store %arg5[%c0_20, %c0_21, %c0_22], %44 {strides = array<i32>} : memref<1x8x128xf32, #tpu.memory_space<vmem>>, vector<1x8x128xf32>,
    } else {
    }
    return
  }
  func.func @transform_0(%arg0: i32, %arg1: i32) -> (i32, i32) {
    %c1_i32 = arith.constant 1 : i32
    %0 = arith.muli %arg0, %c1_i32 : i32
    %1 = arith.addi %0, %arg1 : i32
    %c0_i32 = arith.constant 0 : i32
    %2 = arith.minsi %1, %c0_i32 : i32
    %c0_i32_0 = arith.constant 0 : i32
    %c0_i32_1 = arith.constant 0 : i32
    return %c0_i32_0, %2 : i32, i32
  }
  func.func @transform_1(%arg0: i32, %arg1: i32) -> (i32, i32) {
    %c1_i32 = arith.constant 1 : i32
    %0 = arith.muli %arg0, %c1_i32 : i32
    %1 = arith.addi %0, %arg1 : i32
    %c0_i32 = arith.constant 0 : i32
    %2 = arith.minsi %1, %c0_i32 : i32
    %c0_i32_0 = arith.constant 0 : i32
    %c0_i32_1 = arith.constant 0 : i32
    return %c0_i32_0, %2 : i32, i32
  }
  func.func @transform_2(%arg0: i32, %arg1: i32) -> (i32, i32) {
    %c1_i32 = arith.constant 1 : i32
    %0 = arith.muli %arg0, %c1_i32 : i32
    %1 = arith.addi %0, %arg1 : i32
    %c0_i32 = arith.constant 0 : i32
    %2 = arith.minsi %1, %c0_i32 : i32
    %c0_i32_0 = arith.constant 0 : i32
    %c0_i32_1 = arith.constant 0 : i32
    return %c0_i32_0, %2 : i32, i32
  }
  func.func @transform_3(%arg0: i32, %arg1: i32) -> (i32, i32, i32) {
    %c0_i32 = arith.constant 0 : i32
    %c0_i32_0 = arith.constant 0 : i32
    %c0_i32_1 = arith.constant 0 : i32
    return %arg0, %c0_i32, %c0_i32_0 : i32, i32, i32
  }
}

</mosaic_0001>

<llo_original>
// kernel: tpu_custom_call.1
$region0: #{tpu_custom_call.1}
  #allocation0 [shape = 'u32[]', space=smem, size = 0x4, offset = 0x4, fixed_abs, tag = 'smem constant byte address 0x4 - core index']
  #allocation1 [shape = 'u32[144,128]{1,0:T(1,128)}', space=vmem, size = 0x12000, scoped, tag = 'internal scratch']
  #allocation2 [shape = 'f32[1,512]{1,0:T(1,128)}', space=vmem, size = 0x800, scoped, tag = 'scratch operand']
  %s0 = inlined_call_operand.vmem [shape: f32[32,8], index: 0, kind: input, shape index: {}]
  %s1 = inlined_call_operand.vmem [shape: f32[32,8], index: 1, kind: input, shape index: {}]
  %s2 = inlined_call_operand.vmem [shape: f32[1,8], index: 2, kind: input, shape index: {}]
  %s3 = inlined_call_operand.hbm [shape: f32[1,8,128], index: 3, kind: output, shape index: {}]
  %s4 = sld [smem:[#allocation0]]
  $region162: #{tpu_custom_call.1} parent=0
    _
  %s6 = ssub.s32 1, %s4
  %s7 = scalar_select 0, %s6, %s4
  $region1: #{tpu_custom_call.1} parent=0
    #allocation3 [shape = 'u8[65536]{0}', space=vmem, size = 0x10000, scoped, tag = 'input window, operand 0, single buffered']
    #allocation4 [shape = 'u8[65536]{0}', space=vmem, size = 0x10000, scoped, tag = 'input window, operand 1, single buffered']
    #allocation5 [shape = 'u8[4096]{0}', space=vmem, size = 0x1000, scoped, tag = 'output window, operand 0, single buffered']
    #allocation6 [shape = 's32[1]{0}', space=sflag, size = 0x4, scoped, tag = 'scoped memory for tpu_custom_call.1']
    %8 = vsyncpa [#allocation6], 0
    // Predicated region
    $region2: #{tpu_custom_call.1} parent=1 // pred_check
      _
    $region3: #{tpu_custom_call.1} parent=1 // pred_check_branch
      %10 = sbr.rel (0) target = $region5
    $region4: #{tpu_custom_call.1} parent=1 // pred_region
      %s11 = sadd.s32 0, 0
      %p12 = scmp.lt.s32.totalorder %s11, 0
      %s13 = scalar_select %p12, %s11, 0
      %s14 = smul.u32 4, %s13
      %s15 = ssub.s32 1, %s14
      %s16 = smul.u32 512, %s15
      %p17 = scmp.ne.s32.totalorder 0, %s16
      %s18 = smul.addr %s14, 8
      %s19 = scalar_lea.vmem %s0, %s18
      %s20 = smul.u32 %s15, 8
      // Predicated region
      $region6: #{tpu_custom_call.1} parent=4 // pred_check
        %p21 = pneg %p17
      $region7: #{tpu_custom_call.1} parent=4 // pred_check_branch
        %23 = sbr.rel (%p21) target = $region9
      $region8: #{tpu_custom_call.1} parent=4 // pred_region
        %p24 = scmp.lt.u32.totalorder %s20, 8
        %p25 = pneg %p24
        // Predicated region
        $region10: #{tpu_custom_call.1} parent=8 // pred_check
          _
        $region11: #{tpu_custom_call.1} parent=8 // pred_check_branch
          %27 = sbr.rel (%p24) target = $region13
        $region12: #{tpu_custom_call.1} parent=8 // pred_region
          %s48 = sand.u32 %s20, 7
          %p49 = scmp.eq.s32.totalorder %s48, 0
          // Predicated region
          $region25: #{tpu_custom_call.1} parent=12 // pred_check
            %p50 = pneg %p49
          $region26: #{tpu_custom_call.1} parent=12 // pred_check_branch
            %52 = sbr.rel (%p50) target = $region28
          $region27: #{tpu_custom_call.1} parent=12 // pred_region
            %s53 = sshrl.u32 %s20, 3
            %s54 = sshrl.u32 %s53, 4
            // While loop
            $region29: #{tpu_custom_call.1} parent=27 // loop_pre_header
              _
            $region30: #{tpu_custom_call.1} parent=27 // loop_header
              %s58 = sphi 0, %s60
              %p59 = scmp.ge.s32.totalorder %s58, %s54
              %s63 = sphi 0, %s196
              %s64 = sphi %s19, %s199
              %s65 = sphi [#allocation3], %s200
            $region31: #{tpu_custom_call.1} parent=27 // loop_header_branch
              %62 = sbr.rel (%p59) target = $region35
            $region32: #{tpu_custom_call.1} parent=27 // loop_body
              %v66 = vld [vmem:[%s64] sm:$0xff]
              %67 = vst [vmem:[%s65] sm:$0xff] %v66
              %v68 = vld [vmem:[%s64 + $0x8] sm:$0xff]
              %69 = vst [vmem:[%s65 + $0x8] sm:$0xff] %v68
              %v70 = vld [vmem:[%s64 + $0x10] sm:$0xff]
              %71 = vst [vmem:[%s65 + $0x10] sm:$0xff] %v70
              %v72 = vld [vmem:[%s64 + $0x18] sm:$0xff]
              %73 = vst [vmem:[%s65 + $0x18] sm:$0xff] %v72
              %v74 = vld [vmem:[%s64 + $0x20] sm:$0xff]
              %75 = vst [vmem:[%s65 + $0x20] sm:$0xff] %v74
              %v76 = vld [vmem:[%s64 + $0x28] sm:$0xff]
              %77 = vst [vmem:[%s65 + $0x28] sm:$0xff] %v76
              %v78 = vld [vmem:[%s64 + $0x30] sm:$0xff]
              %79 = vst [vmem:[%s65 + $0x30] sm:$0xff] %v78
              %v80 = vld [vmem:[%s64 + $0x38] sm:$0xff]
              %81 = vst [vmem:[%s65 + $0x38] sm:$0xff] %v80
              %v82 = vld [vmem:[%s64 + $0x40] sm:$0xff]
              %83 = vst [vmem:[%s65 + $0x40] sm:$0xff] %v82
              %v84 = vld [vmem:[%s64 + $0x48] sm:$0xff]
              %85 = vst [vmem:[%s65 + $0x48] sm:$0xff] %v84
              %v86 = vld [vmem:[%s64 + $0x50] sm:$0xff]
              %87 = vst [vmem:[%s65 + $0x50] sm:$0xff] %v86
              %v88 = vld [vmem:[%s64 + $0x58] sm:$0xff]
              %89 = vst [vmem:[%s65 + $0x58] sm:$0xff] %v88
              %v90 = vld [vmem:[%s64 + $0x60] sm:$0xff]
              %91 = vst [vmem:[%s65 + $0x60] sm:$0xff] %v90
              %v92 = vld [vmem:[%s64 + $0x68] sm:$0xff]
              %93 = vst [vmem:[%s65 + $0x68] sm:$0xff] %v92
              %v94 = vld [vmem:[%s64 + $0x70] sm:$0xff]
              %95 = vst [vmem:[%s65 + $0x70] sm:$0xff] %v94
              %v96 = vld [vmem:[%s64 + $0x78] sm:$0xff]
              %97 = vst [vmem:[%s65 + $0x78] sm:$0xff] %v96
              %v98 = vld [vmem:[%s64 + $0x8] sm:$0xff]
              %99 = vst [vmem:[%s65 + $0x20] sm:$0xff] %v98
              %v100 = vld [vmem:[%s64 + $0x10] sm:$0xff]
              %101 = vst [vmem:[%s65 + $0x28] sm:$0xff] %v100
              %v102 = vld [vmem:[%s64 + $0x18] sm:$0xff]
              %103 = vst [vmem:[%s65 + $0x30] sm:$0xff] %v102
              %v104 = vld [vmem:[%s64 + $0x20] sm:$0xff]
              %105 = vst [vmem:[%s65 + $0x38] sm:$0xff] %v104
              %v106 = vld [vmem:[%s64 + $0x28] sm:$0xff]
              %107 = vst [vmem:[%s65 + $0x40] sm:$0xff] %v106
              %v108 = vld [vmem:[%s64 + $0x30] sm:$0xff]
              %109 = vst [vmem:[%s65 + $0x48] sm:$0xff] %v108
              %v110 = vld [vmem:[%s64 + $0x38] sm:$0xff]
              %111 = vst [vmem:[%s65 + $0x50] sm:$0xff] %v110
              %v112 = vld [vmem:[%s64 + $0x40] sm:$0xff]
              %113 = vst [vmem:[%s65 + $0x58] sm:$0xff] %v112
              %v114 = vld [vmem:[%s64 + $0x48] sm:$0xff]
              %115 = vst [vmem:[%s65 + $0x60] sm:$0xff] %v114
              %v116 = vld [vmem:[%s64 + $0x50] sm:$0xff]
              %117 = vst [vmem:[%s65 + $0x68] sm:$0xff] %v116
              %v118 = vld [vmem:[%s64 + $0x58] sm:$0xff]
              %119 = vst [vmem:[%s65 + $0x70] sm:$0xff] %v118
              %v120 = vld [vmem:[%s64 + $0x60] sm:$0xff]
              %121 = vst [vmem:[%s65 + $0x78] sm:$0xff] %v120
              %v122 = vld [vmem:[%s64 + $0x68] sm:$0xff]
              %123 = vst [vmem:[%s65 + $0x80] sm:$0xff] %v122
              %v124 = vld [vmem:[%s64 + $0x70] sm:$0xff]
              %125 = vst [vmem:[%s65 + $0x88] sm:$0xff] %v124
              %v126 = vld [vmem:[%s64 + $0x78] sm:$0xff]
              %127 = vst [vmem:[%s65 + $0x90] sm:$0xff] %v126
              %v128 = vld [vmem:[%s64 + $0x80] sm:$0xff]
              %129 = vst [vmem:[%s65 + $0x98] sm:$0xff] %v128
              %v130 = vld [vmem:[%s64 + $0x10] sm:$0xff]
              %131 = vst [vmem:[%s65 + $0x40] sm:$0xff] %v130
              %v132 = vld [vmem:[%s64 + $0x18] sm:$0xff]
              %133 = vst [vmem:[%s65 + $0x48] sm:$0xff] %v132
              %v134 = vld [vmem:[%s64 + $0x20] sm:$0xff]
              %135 = vst [vmem:[%s65 + $0x50] sm:$0xff] %v134
              %v136 = vld [vmem:[%s64 + $0x28] sm:$0xff]
              %137 = vst [vmem:[%s65 + $0x58] sm:$0xff] %v136
              %v138 = vld [vmem:[%s64 + $0x30] sm:$0xff]
              %139 = vst [vmem:[%s65 + $0x60] sm:$0xff] %v138
              %v140 = vld [vmem:[%s64 + $0x38] sm:$0xff]
              %141 = vst [vmem:[%s65 + $0x68] sm:$0xff] %v140
              %v142 = vld [vmem:[%s64 + $0x40] sm:$0xff]
              %143 = vst [vmem:[%s65 + $0x70] sm:$0xff] %v142
              %v144 = vld [vmem:[%s64 + $0x48] sm:$0xff]
              %145 = vst [vmem:[%s65 + $0x78] sm:$0xff] %v144
              %v146 = vld [vmem:[%s64 + $0x50] sm:$0xff]
              %147 = vst [vmem:[%s65 + $0x80] sm:$0xff] %v146
              %v148 = vld [vmem:[%s64 + $0x58] sm:$0xff]
              %149 = vst [vmem:[%s65 + $0x88] sm:$0xff] %v148
              %v150 = vld [vmem:[%s64 + $0x60] sm:$0xff]
              %151 = vst [vmem:[%s65 + $0x90] sm:$0xff] %v150
              %v152 = vld [vmem:[%s64 + $0x68] sm:$0xff]
              %153 = vst [vmem:[%s65 + $0x98] sm:$0xff] %v152
              %v154 = vld [vmem:[%s64 + $0x70] sm:$0xff]
              %155 = vst [vmem:[%s65 + $0xa0] sm:$0xff] %v154
              %v156 = vld [vmem:[%s64 + $0x78] sm:$0xff]
              %157 = vst [vmem:[%s65 + $0xa8] sm:$0xff] %v156
              %v158 = vld [vmem:[%s64 + $0x80] sm:$0xff]
              %159 = vst [vmem:[%s65 + $0xb0] sm:$0xff] %v158
              %v160 = vld [vmem:[%s64 + $0x88] sm:$0xff]
              %161 = vst [vmem:[%s65 + $0xb8] sm:$0xff] %v160
              %v162 = vld [vmem:[%s64 + $0x18] sm:$0xff]
              %163 = vst [vmem:[%s65 + $0x60] sm:$0xff] %v162
              %v164 = vld [vmem:[%s64 + $0x20] sm:$0xff]
              %165 = vst [vmem:[%s65 + $0x68] sm:$0xff] %v164
              %v166 = vld [vmem:[%s64 + $0x28] sm:$0xff]
              %167 = vst [vmem:[%s65 + $0x70] sm:$0xff] %v166
              %v168 = vld [vmem:[%s64 + $0x30] sm:$0xff]
              %169 = vst [vmem:[%s65 + $0x78] sm:$0xff] %v168
              %v170 = vld [vmem:[%s64 + $0x38] sm:$0xff]
              %171 = vst [vmem:[%s65 + $0x80] sm:$0xff] %v170
              %v172 = vld [vmem:[%s64 + $0x40] sm:$0xff]
              %173 = vst [vmem:[%s65 + $0x88] sm:$0xff] %v172
              %v174 = vld [vmem:[%s64 + $0x48] sm:$0xff]
              %175 = vst [vmem:[%s65 + $0x90] sm:$0xff] %v174
              %v176 = vld [vmem:[%s64 + $0x50] sm:$0xff]
              %177 = vst [vmem:[%s65 + $0x98] sm:$0xff] %v176
              %v178 = vld [vmem:[%s64 + $0x58] sm:$0xff]
              %179 = vst [vmem:[%s65 + $0xa0] sm:$0xff] %v178
              %v180 = vld [vmem:[%s64 + $0x60] sm:$0xff]
              %181 = vst [vmem:[%s65 + $0xa8] sm:$0xff] %v180
              %v182 = vld [vmem:[%s64 + $0x68] sm:$0xff]
              %183 = vst [vmem:[%s65 + $0xb0] sm:$0xff] %v182
              %v184 = vld [vmem:[%s64 + $0x70] sm:$0xff]
              %185 = vst [vmem:[%s65 + $0xb8] sm:$0xff] %v184
              %v186 = vld [vmem:[%s64 + $0x78] sm:$0xff]
              %187 = vst [vmem:[%s65 + $0xc0] sm:$0xff] %v186
              %v188 = vld [vmem:[%s64 + $0x80] sm:$0xff]
              %189 = vst [vmem:[%s65 + $0xc8] sm:$0xff] %v188
              %v190 = vld [vmem:[%s64 + $0x88] sm:$0xff]
              %191 = vst [vmem:[%s65 + $0xd0] sm:$0xff] %v190
              %v192 = vld [vmem:[%s64 + $0x90] sm:$0xff]
              %193 = vst [vmem:[%s65 + $0xd8] sm:$0xff] %v192
              %s194 = sadd.s32 1, %s63
              %p195 = scmp.ge.s32.totalorder %s194, %s54
              %s196 = scalar_select %p195, 0, %s194
              %s197 = smul.u32 %s196, 128
              %s198 = smul.u32 %s196, 128
              %s199 = scalar_lea.vmem %s19, %s197
              %s200 = scalar_lea.vmem [#allocation3], %s198
            $region33: #{tpu_custom_call.1} parent=27 // loop_footer
              %s60 = sadd.s32 %s58, 1
            $region34: #{tpu_custom_call.1} parent=27 // loop_footer_branch
              %57 = sbr.rel target = $region30
            $region35: #{tpu_custom_call.1} parent=27 // loop_exit
              _
            %s201 = sshrl.u32 %s53, 4
            %s202 = sand.u32 %s53, 15
            %s203 = smul.u32 %s201, 16
            %s204 = smul.u32 128, %s203
            %s205 = sshra.s32 %s204, 4
            %s206 = scalar_lea.vmem %s19, %s205
            %s207 = smul.u32 128, %s203
            %s208 = sshra.s32 %s207, 4
            %s209 = scalar_lea.vmem [#allocation3], %s208
            // While loop
            $region36: #{tpu_custom_call.1} parent=27 // loop_pre_header
              _
            $region37: #{tpu_custom_call.1} parent=27 // loop_header
              %s213 = sphi 0, %s215
              %p214 = scmp.ge.s32.totalorder %s213, %s202
              %s218 = sphi 0, %s231
              %s219 = sphi %s206, %s234
              %s220 = sphi %s209, %s235
            $region38: #{tpu_custom_call.1} parent=27 // loop_header_branch
              %217 = sbr.rel (%p214) target = $region42
            $region39: #{tpu_custom_call.1} parent=27 // loop_body
              %v221 = vld [vmem:[%s219] sm:$0xff]
              %222 = vst [vmem:[%s220] sm:$0xff] %v221
              %v223 = vld [vmem:[%s219 + $0x8] sm:$0xff]
              %224 = vst [vmem:[%s220 + $0x20] sm:$0xff] %v223
              %v225 = vld [vmem:[%s219 + $0x10] sm:$0xff]
              %226 = vst [vmem:[%s220 + $0x40] sm:$0xff] %v225
              %v227 = vld [vmem:[%s219 + $0x18] sm:$0xff]
              %228 = vst [vmem:[%s220 + $0x60] sm:$0xff] %v227
              %s229 = sadd.s32 1, %s218
              %p230 = scmp.ge.s32.totalorder %s229, %s202
              %s231 = scalar_select %p230, 0, %s229
              %s232 = smul.u32 %s231, 8
              %s233 = smul.u32 %s231, 8
              %s234 = scalar_lea.vmem %s206, %s232
              %s235 = scalar_lea.vmem %s209, %s233 [#allocation3]
            $region40: #{tpu_custom_call.1} parent=27 // loop_footer
              %s215 = sadd.s32 %s213, 1
            $region41: #{tpu_custom_call.1} parent=27 // loop_footer_branch
              %212 = sbr.rel target = $region37
            $region42: #{tpu_custom_call.1} parent=27 // loop_exit
              _
          $region28: #{tpu_custom_call.1} parent=12 // pred_fallthru
            _
          %p236 = pneg %p49
          // Predicated region
          $region43: #{tpu_custom_call.1} parent=12 // pred_check
            _
          $region44: #{tpu_custom_call.1} parent=12 // pred_check_branch
            %238 = sbr.rel (%p49) target = $region46
          $region45: #{tpu_custom_call.1} parent=12 // pred_region
            %s239 = sand.u32 %s20, 7
            %s240 = ssub.s32 %s20, %s239
            %s241 = scalar_lea.vmem %s19, %s240
            %s242 = ssub.s32 %s20, %s239
            %s243 = scalar_lea.vmem [#allocation3], %s242
            %s244 = sshrl.u32 %s20, 3
            %s245 = sshrl.u32 %s244, 4
            // While loop
            $region47: #{tpu_custom_call.1} parent=45 // loop_pre_header
              _
            $region48: #{tpu_custom_call.1} parent=45 // loop_header
              %s249 = sphi 0, %s251
              %p250 = scmp.ge.s32.totalorder %s249, %s245
              %s254 = sphi 0, %s387
              %s255 = sphi %s19, %s390
              %s256 = sphi [#allocation3], %s391
            $region49: #{tpu_custom_call.1} parent=45 // loop_header_branch
              %253 = sbr.rel (%p250) target = $region53
            $region50: #{tpu_custom_call.1} parent=45 // loop_body
              %v257 = vld [vmem:[%s255] sm:$0xff]
              %258 = vst [vmem:[%s256] sm:$0xff] %v257
              %v259 = vld [vmem:[%s255 + $0x8] sm:$0xff]
              %260 = vst [vmem:[%s256 + $0x8] sm:$0xff] %v259
              %v261 = vld [vmem:[%s255 + $0x10] sm:$0xff]
              %262 = vst [vmem:[%s256 + $0x10] sm:$0xff] %v261
              %v263 = vld [vmem:[%s255 + $0x18] sm:$0xff]
              %264 = vst [vmem:[%s256 + $0x18] sm:$0xff] %v263
              %v265 = vld [vmem:[%s255 + $0x20] sm:$0xff]
              %266 = vst [vmem:[%s256 + $0x20] sm:$0xff] %v265
              %v267 = vld [vmem:[%s255 + $0x28] sm:$0xff]
              %268 = vst [vmem:[%s256 + $0x28] sm:$0xff] %v267
              %v269 = vld [vmem:[%s255 + $0x30] sm:$0xff]
              %270 = vst [vmem:[%s256 + $0x30] sm:$0xff] %v269
              %v271 = vld [vmem:[%s255 + $0x38] sm:$0xff]
              %272 = vst [vmem:[%s256 + $0x38] sm:$0xff] %v271
              %v273 = vld [vmem:[%s255 + $0x40] sm:$0xff]
              %274 = vst [vmem:[%s256 + $0x40] sm:$0xff] %v273
              %v275 = vld [vmem:[%s255 + $0x48] sm:$0xff]
              %276 = vst [vmem:[%s256 + $0x48] sm:$0xff] %v275
              %v277 = vld [vmem:[%s255 + $0x50] sm:$0xff]
              %278 = vst [vmem:[%s256 + $0x50] sm:$0xff] %v277
              %v279 = vld [vmem:[%s255 + $0x58] sm:$0xff]
              %280 = vst [vmem:[%s256 + $0x58] sm:$0xff] %v279
              %v281 = vld [vmem:[%s255 + $0x60] sm:$0xff]
              %282 = vst [vmem:[%s256 + $0x60] sm:$0xff] %v281
              %v283 = vld [vmem:[%s255 + $0x68] sm:$0xff]
              %284 = vst [vmem:[%s256 + $0x68] sm:$0xff] %v283
              %v285 = vld [vmem:[%s255 + $0x70] sm:$0xff]
              %286 = vst [vmem:[%s256 + $0x70] sm:$0xff] %v285
              %v287 = vld [vmem:[%s255 + $0x78] sm:$0xff]
              %288 = vst [vmem:[%s256 + $0x78] sm:$0xff] %v287
              %v289 = vld [vmem:[%s255 + $0x8] sm:$0xff]
              %290 = vst [vmem:[%s256 + $0x20] sm:$0xff] %v289
              %v291 = vld [vmem:[%s255 + $0x10] sm:$0xff]
              %292 = vst [vmem:[%s256 + $0x28] sm:$0xff] %v291
              %v293 = vld [vmem:[%s255 + $0x18] sm:$0xff]
              %294 = vst [vmem:[%s256 + $0x30] sm:$0xff] %v293
              %v295 = vld [vmem:[%s255 + $0x20] sm:$0xff]
              %296 = vst [vmem:[%s256 + $0x38] sm:$0xff] %v295
              %v297 = vld [vmem:[%s255 + $0x28] sm:$0xff]
              %298 = vst [vmem:[%s256 + $0x40] sm:$0xff] %v297
              %v299 = vld [vmem:[%s255 + $0x30] sm:$0xff]
              %300 = vst [vmem:[%s256 + $0x48] sm:$0xff] %v299
              %v301 = vld [vmem:[%s255 + $0x38] sm:$0xff]
              %302 = vst [vmem:[%s256 + $0x50] sm:$0xff] %v301
              %v303 = vld [vmem:[%s255 + $0x40] sm:$0xff]
              %304 = vst [vmem:[%s256 + $0x58] sm:$0xff] %v303
              %v305 = vld [vmem:[%s255 + $0x48] sm:$0xff]
              %306 = vst [vmem:[%s256 + $0x60] sm:$0xff] %v305
              %v307 = vld [vmem:[%s255 + $0x50] sm:$0xff]
              %308 = vst [vmem:[%s256 + $0x68] sm:$0xff] %v307
              %v309 = vld [vmem:[%s255 + $0x58] sm:$0xff]
              %310 = vst [vmem:[%s256 + $0x70] sm:$0xff] %v309
              %v311 = vld [vmem:[%s255 + $0x60] sm:$0xff]
              %312 = vst [vmem:[%s256 + $0x78] sm:$0xff] %v311
              %v313 = vld [vmem:[%s255 + $0x68] sm:$0xff]
              %314 = vst [vmem:[%s256 + $0x80] sm:$0xff] %v313
              %v315 = vld [vmem:[%s255 + $0x70] sm:$0xff]
              %316 = vst [vmem:[%s256 + $0x88] sm:$0xff] %v315
              %v317 = vld [vmem:[%s255 + $0x78] sm:$0xff]
              %318 = vst [vmem:[%s256 + $0x90] sm:$0xff] %v317
              %v319 = vld [vmem:[%s255 + $0x80] sm:$0xff]
              %320 = vst [vmem:[%s256 + $0x98] sm:$0xff] %v319
              %v321 = vld [vmem:[%s255 + $0x10] sm:$0xff]
              %322 = vst [vmem:[%s256 + $0x40] sm:$0xff] %v321
              %v323 = vld [vmem:[%s255 + $0x18] sm:$0xff]
              %324 = vst [vmem:[%s256 + $0x48] sm:$0xff] %v323
              %v325 = vld [vmem:[%s255 + $0x20] sm:$0xff]
              %326 = vst [vmem:[%s256 + $0x50] sm:$0xff] %v325
              %v327 = vld [vmem:[%s255 + $0x28] sm:$0xff]
              %328 = vst [vmem:[%s256 + $0x58] sm:$0xff] %v327
              %v329 = vld [vmem:[%s255 + $0x30] sm:$0xff]
              %330 = vst [vmem:[%s256 + $0x60] sm:$0xff] %v329
              %v331 = vld [vmem:[%s255 + $0x38] sm:$0xff]
              %332 = vst [vmem:[%s256 + $0x68] sm:$0xff] %v331
              %v333 = vld [vmem:[%s255 + $0x40] sm:$0xff]
              %334 = vst [vmem:[%s256 + $0x70] sm:$0xff] %v333
              %v335 = vld [vmem:[%s255 + $0x48] sm:$0xff]
              %336 = vst [vmem:[%s256 + $0x78] sm:$0xff] %v335
              %v337 = vld [vmem:[%s255 + $0x50] sm:$0xff]
              %338 = vst [vmem:[%s256 + $0x80] sm:$0xff] %v337
              %v339 = vld [vmem:[%s255 + $0x58] sm:$0xff]
              %340 = vst [vmem:[%s256 + $0x88] sm:$0xff] %v339
              %v341 = vld [vmem:[%s255 + $0x60] sm:$0xff]
              %342 = vst [vmem:[%s256 + $0x90] sm:$0xff] %v341
              %v343 = vld [vmem:[%s255 + $0x68] sm:$0xff]
              %344 = vst [vmem:[%s256 + $0x98] sm:$0xff] %v343
              %v345 = vld [vmem:[%s255 + $0x70] sm:$0xff]
              %346 = vst [vmem:[%s256 + $0xa0] sm:$0xff] %v345
              %v347 = vld [vmem:[%s255 + $0x78] sm:$0xff]
              %348 = vst [vmem:[%s256 + $0xa8] sm:$0xff] %v347
              %v349 = vld [vmem:[%s255 + $0x80] sm:$0xff]
              %350 = vst [vmem:[%s256 + $0xb0] sm:$0xff] %v349
              %v351 = vld [vmem:[%s255 + $0x88] sm:$0xff]
              %352 = vst [vmem:[%s256 + $0xb8] sm:$0xff] %v351
              %v353 = vld [vmem:[%s255 + $0x18] sm:$0xff]
              %354 = vst [vmem:[%s256 + $0x60] sm:$0xff] %v353
              %v355 = vld [vmem:[%s255 + $0x20] sm:$0xff]
              %356 = vst [vmem:[%s256 + $0x68] sm:$0xff] %v355
              %v357 = vld [vmem:[%s255 + $0x28] sm:$0xff]
              %358 = vst [vmem:[%s256 + $0x70] sm:$0xff] %v357
              %v359 = vld [vmem:[%s255 + $0x30] sm:$0xff]
              %360 = vst [vmem:[%s256 + $0x78] sm:$0xff] %v359
              %v361 = vld [vmem:[%s255 + $0x38] sm:$0xff]
              %362 = vst [vmem:[%s256 + $0x80] sm:$0xff] %v361
              %v363 = vld [vmem:[%s255 + $0x40] sm:$0xff]
              %364 = vst [vmem:[%s256 + $0x88] sm:$0xff] %v363
              %v365 = vld [vmem:[%s255 + $0x48] sm:$0xff]
              %366 = vst [vmem:[%s256 + $0x90] sm:$0xff] %v365
              %v367 = vld [vmem:[%s255 + $0x50] sm:$0xff]
              %368 = vst [vmem:[%s256 + $0x98] sm:$0xff] %v367
              %v369 = vld [vmem:[%s255 + $0x58] sm:$0xff]
              %370 = vst [vmem:[%s256 + $0xa0] sm:$0xff] %v369
              %v371 = vld [vmem:[%s255 + $0x60] sm:$0xff]
              %372 = vst [vmem:[%s256 + $0xa8] sm:$0xff] %v371
              %v373 = vld [vmem:[%s255 + $0x68] sm:$0xff]
              %374 = vst [vmem:[%s256 + $0xb0] sm:$0xff] %v373
              %v375 = vld [vmem:[%s255 + $0x70] sm:$0xff]
              %376 = vst [vmem:[%s256 + $0xb8] sm:$0xff] %v375
              %v377 = vld [vmem:[%s255 + $0x78] sm:$0xff]
              %378 = vst [vmem:[%s256 + $0xc0] sm:$0xff] %v377
              %v379 = vld [vmem:[%s255 + $0x80] sm:$0xff]
              %380 = vst [vmem:[%s256 + $0xc8] sm:$0xff] %v379
              %v381 = vld [vmem:[%s255 + $0x88] sm:$0xff]
              %382 = vst [vmem:[%s256 + $0xd0] sm:$0xff] %v381
              %v383 = vld [vmem:[%s255 + $0x90] sm:$0xff]
              %384 = vst [vmem:[%s256 + $0xd8] sm:$0xff] %v383
              %s385 = sadd.s32 1, %s254
              %p386 = scmp.ge.s32.totalorder %s385, %s245
              %s387 = scalar_select %p386, 0, %s385
              %s388 = smul.u32 %s387, 128
              %s389 = smul.u32 %s387, 128
              %s390 = scalar_lea.vmem %s19, %s388
              %s391 = scalar_lea.vmem [#allocation3], %s389
            $region51: #{tpu_custom_call.1} parent=45 // loop_footer
              %s251 = sadd.s32 %s249, 1
            $region52: #{tpu_custom_call.1} parent=45 // loop_footer_branch
              %248 = sbr.rel target = $region48
            $region53: #{tpu_custom_call.1} parent=45 // loop_exit
              _
            %s392 = sshrl.u32 %s244, 4
            %s393 = sand.u32 %s244, 15
            %s394 = smul.u32 %s392, 16
            %s395 = smul.u32 128, %s394
            %s396 = sshra.s32 %s395, 4
            %s397 = scalar_lea.vmem %s19, %s396
            %s398 = smul.u32 128, %s394
            %s399 = sshra.s32 %s398, 4
            %s400 = scalar_lea.vmem [#allocation3], %s399
            // While loop
            $region54: #{tpu_custom_call.1} parent=45 // loop_pre_header
              _
            $region55: #{tpu_custom_call.1} parent=45 // loop_header
              %s404 = sphi 0, %s406
              %p405 = scmp.ge.s32.totalorder %s404, %s393
              %s409 = sphi 0, %s422
              %s410 = sphi %s397, %s425
              %s411 = sphi %s400, %s426
            $region56: #{tpu_custom_call.1} parent=45 // loop_header_branch
              %408 = sbr.rel (%p405) target = $region60
            $region57: #{tpu_custom_call.1} parent=45 // loop_body
              %v412 = vld [vmem:[%s410] sm:$0xff]
              %413 = vst [vmem:[%s411] sm:$0xff] %v412
              %v414 = vld [vmem:[%s410 + $0x8] sm:$0xff]
              %415 = vst [vmem:[%s411 + $0x20] sm:$0xff] %v414
              %v416 = vld [vmem:[%s410 + $0x10] sm:$0xff]
              %417 = vst [vmem:[%s411 + $0x40] sm:$0xff] %v416
              %v418 = vld [vmem:[%s410 + $0x18] sm:$0xff]
              %419 = vst [vmem:[%s411 + $0x60] sm:$0xff] %v418
              %s420 = sadd.s32 1, %s409
              %p421 = scmp.ge.s32.totalorder %s420, %s393
              %s422 = scalar_select %p421, 0, %s420
              %s423 = smul.u32 %s422, 8
              %s424 = smul.u32 %s422, 8
              %s425 = scalar_lea.vmem %s397, %s423
              %s426 = scalar_lea.vmem %s400, %s424 [#allocation3]
            $region58: #{tpu_custom_call.1} parent=45 // loop_footer
              %s406 = sadd.s32 %s404, 1
            $region59: #{tpu_custom_call.1} parent=45 // loop_footer_branch
              %403 = sbr.rel target = $region55
            $region60: #{tpu_custom_call.1} parent=45 // loop_exit
              _
            %s427 = sshllo.u32 0, %s239
            loop: start=0, step=1, limit=1
            $region61: #{tpu_custom_call.1} parent=45 // loop_pre_header
              _
            $region62: #{tpu_custom_call.1} parent=45 // loop_header
              %s429 = sphi 0, %s433
              %p430 = scmp.ge.s32.totalorder %s429, 1
              %s434 = sphi %s241, %s241
              %s435 = sphi %s243, %s243
            $region63: #{tpu_custom_call.1} parent=45 // loop_header_branch
              %432 = sbr.rel (%p430) target = $region67
            $region64: #{tpu_custom_call.1} parent=45 // loop_body
              %v436 = vld [vmem:[%s434] sm:%s427]
              %437 = vst [vmem:[%s435] sm:%s427] %v436
              %v438 = vld [vmem:[%s434 + $0x8] sm:%s427]
              %439 = vst [vmem:[%s435 + $0x20] sm:%s427] %v438
              %v440 = vld [vmem:[%s434 + $0x10] sm:%s427]
              %441 = vst [vmem:[%s435 + $0x40] sm:%s427] %v440
              %v442 = vld [vmem:[%s434 + $0x18] sm:%s427]
              %443 = vst [vmem:[%s435 + $0x60] sm:%s427] %v442
            $region65: #{tpu_custom_call.1} parent=45 // loop_footer
              %s433 = sadd.s32 1, %s429
            $region66: #{tpu_custom_call.1} parent=45 // loop_footer_branch
              %428 = sbr.rel target = $region62
            $region67: #{tpu_custom_call.1} parent=45 // loop_exit
              _
          $region46: #{tpu_custom_call.1} parent=12 // pred_fallthru
            _
        $region13: #{tpu_custom_call.1} parent=8 // pred_fallthru
          _
        // Predicated region
        $region14: #{tpu_custom_call.1} parent=8 // pred_check
          %p28 = pneg %p24
        $region15: #{tpu_custom_call.1} parent=8 // pred_check_branch
          %30 = sbr.rel (%p28) target = $region17
        $region16: #{tpu_custom_call.1} parent=8 // pred_region
          %s31 = sshllo.u32 0, %s20
          loop: start=0, step=1, limit=1
          $region18: #{tpu_custom_call.1} parent=16 // loop_pre_header
            _
          $region19: #{tpu_custom_call.1} parent=16 // loop_header
            %s33 = sphi 0, %s37
            %p34 = scmp.ge.s32.totalorder %s33, 1
            %s38 = sphi %s19, %s19
            %s39 = sphi [#allocation3], [#allocation3]
          $region20: #{tpu_custom_call.1} parent=16 // loop_header_branch
            %36 = sbr.rel (%p34) target = $region24
          $region21: #{tpu_custom_call.1} parent=16 // loop_body
            %v40 = vld [vmem:[%s38] sm:%s31]
            %41 = vst [vmem:[%s39] sm:%s31] %v40
            %v42 = vld [vmem:[%s38 + $0x8] sm:%s31]
            %43 = vst [vmem:[%s39 + $0x20] sm:%s31] %v42
            %v44 = vld [vmem:[%s38 + $0x10] sm:%s31]
            %45 = vst [vmem:[%s39 + $0x40] sm:%s31] %v44
            %v46 = vld [vmem:[%s38 + $0x18] sm:%s31]
            %47 = vst [vmem:[%s39 + $0x60] sm:%s31] %v46
          $region22: #{tpu_custom_call.1} parent=16 // loop_footer
            %s37 = sadd.s32 1, %s33
          $region23: #{tpu_custom_call.1} parent=16 // loop_footer_branch
            %32 = sbr.rel target = $region19
          $region24: #{tpu_custom_call.1} parent=16 // loop_exit
            _
        $region17: #{tpu_custom_call.1} parent=8 // pred_fallthru
          _
      $region9: #{tpu_custom_call.1} parent=4 // pred_fallthru
        _
      %444 = vnop
    $region5: #{tpu_custom_call.1} parent=1 // pred_fallthru
      _
    // Predicated region
    $region68: #{tpu_custom_call.1} parent=1 // pred_check
      _
    $region69: #{tpu_custom_call.1} parent=1 // pred_check_branch
      %446 = sbr.rel (0) target = $region71
    $region70: #{tpu_custom_call.1} parent=1 // pred_region
      %s447 = sadd.s32 0, 0
      %p448 = scmp.lt.s32.totalorder %s447, 0
      %s449 = scalar_select %p448, %s447, 0
      %s450 = smul.u32 4, %s449
      %s451 = ssub.s32 1, %s450
      %s452 = smul.u32 512, %s451
      %p453 = scmp.ne.s32.totalorder 0, %s452
      %s454 = smul.addr %s450, 8
      %s455 = scalar_lea.vmem %s1, %s454
      %s456 = smul.u32 %s451, 8
      // Predicated region
      $region72: #{tpu_custom_call.1} parent=70 // pred_check
        %p457 = pneg %p453
      $region73: #{tpu_custom_call.1} parent=70 // pred_check_branch
        %459 = sbr.rel (%p457) target = $region75
      $region74: #{tpu_custom_call.1} parent=70 // pred_region
        %p460 = scmp.lt.u32.totalorder %s456, 8
        %p461 = pneg %p460
        // Predicated region
        $region76: #{tpu_custom_call.1} parent=74 // pred_check
          _
        $region77: #{tpu_custom_call.1} parent=74 // pred_check_branch
          %463 = sbr.rel (%p460) target = $region79
        $region78: #{tpu_custom_call.1} parent=74 // pred_region
          %s484 = sand.u32 %s456, 7
          %p485 = scmp.eq.s32.totalorder %s484, 0
          // Predicated region
          $region91: #{tpu_custom_call.1} parent=78 // pred_check
            %p486 = pneg %p485
          $region92: #{tpu_custom_call.1} parent=78 // pred_check_branch
            %488 = sbr.rel (%p486) target = $region94
          $region93: #{tpu_custom_call.1} parent=78 // pred_region
            %s489 = sshrl.u32 %s456, 3
            %s490 = sshrl.u32 %s489, 4
            // While loop
            $region95: #{tpu_custom_call.1} parent=93 // loop_pre_header
              _
            $region96: #{tpu_custom_call.1} parent=93 // loop_header
              %s494 = sphi 0, %s496
              %p495 = scmp.ge.s32.totalorder %s494, %s490
              %s499 = sphi 0, %s632
              %s500 = sphi %s455, %s635
              %s501 = sphi [#allocation4], %s636
            $region97: #{tpu_custom_call.1} parent=93 // loop_header_branch
              %498 = sbr.rel (%p495) target = $region101
            $region98: #{tpu_custom_call.1} parent=93 // loop_body
              %v502 = vld [vmem:[%s500] sm:$0xff]
              %503 = vst [vmem:[%s501] sm:$0xff] %v502
              %v504 = vld [vmem:[%s500 + $0x8] sm:$0xff]
              %505 = vst [vmem:[%s501 + $0x8] sm:$0xff] %v504
              %v506 = vld [vmem:[%s500 + $0x10] sm:$0xff]
              %507 = vst [vmem:[%s501 + $0x10] sm:$0xff] %v506
              %v508 = vld [vmem:[%s500 + $0x18] sm:$0xff]
              %509 = vst [vmem:[%s501 + $0x18] sm:$0xff] %v508
              %v510 = vld [vmem:[%s500 + $0x20] sm:$0xff]
              %511 = vst [vmem:[%s501 + $0x20] sm:$0xff] %v510
              %v512 = vld [vmem:[%s500 + $0x28] sm:$0xff]
              %513 = vst [vmem:[%s501 + $0x28] sm:$0xff] %v512
              %v514 = vld [vmem:[%s500 + $0x30] sm:$0xff]
              %515 = vst [vmem:[%s501 + $0x30] sm:$0xff] %v514
              %v516 = vld [vmem:[%s500 + $0x38] sm:$0xff]
              %517 = vst [vmem:[%s501 + $0x38] sm:$0xff] %v516
              %v518 = vld [vmem:[%s500 + $0x40] sm:$0xff]
              %519 = vst [vmem:[%s501 + $0x40] sm:$0xff] %v518
              %v520 = vld [vmem:[%s500 + $0x48] sm:$0xff]
              %521 = vst [vmem:[%s501 + $0x48] sm:$0xff] %v520
              %v522 = vld [vmem:[%s500 + $0x50] sm:$0xff]
              %523 = vst [vmem:[%s501 + $0x50] sm:$0xff] %v522
              %v524 = vld [vmem:[%s500 + $0x58] sm:$0xff]
              %525 = vst [vmem:[%s501 + $0x58] sm:$0xff] %v524
              %v526 = vld [vmem:[%s500 + $0x60] sm:$0xff]
              %527 = vst [vmem:[%s501 + $0x60] sm:$0xff] %v526
              %v528 = vld [vmem:[%s500 + $0x68] sm:$0xff]
              %529 = vst [vmem:[%s501 + $0x68] sm:$0xff] %v528
              %v530 = vld [vmem:[%s500 + $0x70] sm:$0xff]
              %531 = vst [vmem:[%s501 + $0x70] sm:$0xff] %v530
              %v532 = vld [vmem:[%s500 + $0x78] sm:$0xff]
              %533 = vst [vmem:[%s501 + $0x78] sm:$0xff] %v532
              %v534 = vld [vmem:[%s500 + $0x8] sm:$0xff]
              %535 = vst [vmem:[%s501 + $0x20] sm:$0xff] %v534
              %v536 = vld [vmem:[%s500 + $0x10] sm:$0xff]
              %537 = vst [vmem:[%s501 + $0x28] sm:$0xff] %v536
              %v538 = vld [vmem:[%s500 + $0x18] sm:$0xff]
              %539 = vst [vmem:[%s501 + $0x30] sm:$0xff] %v538
              %v540 = vld [vmem:[%s500 + $0x20] sm:$0xff]
              %541 = vst [vmem:[%s501 + $0x38] sm:$0xff] %v540
              %v542 = vld [vmem:[%s500 + $0x28] sm:$0xff]
              %543 = vst [vmem:[%s501 + $0x40] sm:$0xff] %v542
              %v544 = vld [vmem:[%s500 + $0x30] sm:$0xff]
              %545 = vst [vmem:[%s501 + $0x48] sm:$0xff] %v544
              %v546 = vld [vmem:[%s500 + $0x38] sm:$0xff]
              %547 = vst [vmem:[%s501 + $0x50] sm:$0xff] %v546
              %v548 = vld [vmem:[%s500 + $0x40] sm:$0xff]
              %549 = vst [vmem:[%s501 + $0x58] sm:$0xff] %v548
              %v550 = vld [vmem:[%s500 + $0x48] sm:$0xff]
              %551 = vst [vmem:[%s501 + $0x60] sm:$0xff] %v550
              %v552 = vld [vmem:[%s500 + $0x50] sm:$0xff]
              %553 = vst [vmem:[%s501 + $0x68] sm:$0xff] %v552
              %v554 = vld [vmem:[%s500 + $0x58] sm:$0xff]
              %555 = vst [vmem:[%s501 + $0x70] sm:$0xff] %v554
              %v556 = vld [vmem:[%s500 + $0x60] sm:$0xff]
              %557 = vst [vmem:[%s501 + $0x78] sm:$0xff] %v556
              %v558 = vld [vmem:[%s500 + $0x68] sm:$0xff]
              %559 = vst [vmem:[%s501 + $0x80] sm:$0xff] %v558
              %v560 = vld [vmem:[%s500 + $0x70] sm:$0xff]
              %561 = vst [vmem:[%s501 + $0x88] sm:$0xff] %v560
              %v562 = vld [vmem:[%s500 + $0x78] sm:$0xff]
              %563 = vst [vmem:[%s501 + $0x90] sm:$0xff] %v562
              %v564 = vld [vmem:[%s500 + $0x80] sm:$0xff]
              %565 = vst [vmem:[%s501 + $0x98] sm:$0xff] %v564
              %v566 = vld [vmem:[%s500 + $0x10] sm:$0xff]
              %567 = vst [vmem:[%s501 + $0x40] sm:$0xff] %v566
              %v568 = vld [vmem:[%s500 + $0x18] sm:$0xff]
              %569 = vst [vmem:[%s501 + $0x48] sm:$0xff] %v568
              %v570 = vld [vmem:[%s500 + $0x20] sm:$0xff]
              %571 = vst [vmem:[%s501 + $0x50] sm:$0xff] %v570
              %v572 = vld [vmem:[%s500 + $0x28] sm:$0xff]
              %573 = vst [vmem:[%s501 + $0x58] sm:$0xff] %v572
              %v574 = vld [vmem:[%s500 + $0x30] sm:$0xff]
              %575 = vst [vmem:[%s501 + $0x60] sm:$0xff] %v574
              %v576 = vld [vmem:[%s500 + $0x38] sm:$0xff]
              %577 = vst [vmem:[%s501 + $0x68] sm:$0xff] %v576
              %v578 = vld [vmem:[%s500 + $0x40] sm:$0xff]
              %579 = vst [vmem:[%s501 + $0x70] sm:$0xff] %v578
              %v580 = vld [vmem:[%s500 + $0x48] sm:$0xff]
              %581 = vst [vmem:[%s501 + $0x78] sm:$0xff] %v580
              %v582 = vld [vmem:[%s500 + $0x50] sm:$0xff]
              %583 = vst [vmem:[%s501 + $0x80] sm:$0xff] %v582
              %v584 = vld [vmem:[%s500 + $0x58] sm:$0xff]
              %585 = vst [vmem:[%s501 + $0x88] sm:$0xff] %v584
              %v586 = vld [vmem:[%s500 + $0x60] sm:$0xff]
              %587 = vst [vmem:[%s501 + $0x90] sm:$0xff] %v586
              %v588 = vld [vmem:[%s500 + $0x68] sm:$0xff]
              %589 = vst [vmem:[%s501 + $0x98] sm:$0xff] %v588
              %v590 = vld [vmem:[%s500 + $0x70] sm:$0xff]
              %591 = vst [vmem:[%s501 + $0xa0] sm:$0xff] %v590
              %v592 = vld [vmem:[%s500 + $0x78] sm:$0xff]
              %593 = vst [vmem:[%s501 + $0xa8] sm:$0xff] %v592
              %v594 = vld [vmem:[%s500 + $0x80] sm:$0xff]
              %595 = vst [vmem:[%s501 + $0xb0] sm:$0xff] %v594
              %v596 = vld [vmem:[%s500 + $0x88] sm:$0xff]
              %597 = vst [vmem:[%s501 + $0xb8] sm:$0xff] %v596
              %v598 = vld [vmem:[%s500 + $0x18] sm:$0xff]
              %599 = vst [vmem:[%s501 + $0x60] sm:$0xff] %v598
              %v600 = vld [vmem:[%s500 + $0x20] sm:$0xff]
              %601 = vst [vmem:[%s501 + $0x68] sm:$0xff] %v600
              %v602 = vld [vmem:[%s500 + $0x28] sm:$0xff]
              %603 = vst [vmem:[%s501 + $0x70] sm:$0xff] %v602
              %v604 = vld [vmem:[%s500 + $0x30] sm:$0xff]
              %605 = vst [vmem:[%s501 + $0x78] sm:$0xff] %v604
              %v606 = vld [vmem:[%s500 + $0x38] sm:$0xff]
              %607 = vst [vmem:[%s501 + $0x80] sm:$0xff] %v606
              %v608 = vld [vmem:[%s500 + $0x40] sm:$0xff]
              %609 = vst [vmem:[%s501 + $0x88] sm:$0xff] %v608
              %v610 = vld [vmem:[%s500 + $0x48] sm:$0xff]
              %611 = vst [vmem:[%s501 + $0x90] sm:$0xff] %v610
              %v612 = vld [vmem:[%s500 + $0x50] sm:$0xff]
              %613 = vst [vmem:[%s501 + $0x98] sm:$0xff] %v612
              %v614 = vld [vmem:[%s500 + $0x58] sm:$0xff]
              %615 = vst [vmem:[%s501 + $0xa0] sm:$0xff] %v614
              %v616 = vld [vmem:[%s500 + $0x60] sm:$0xff]
              %617 = vst [vmem:[%s501 + $0xa8] sm:$0xff] %v616
              %v618 = vld [vmem:[%s500 + $0x68] sm:$0xff]
              %619 = vst [vmem:[%s501 + $0xb0] sm:$0xff] %v618
              %v620 = vld [vmem:[%s500 + $0x70] sm:$0xff]
              %621 = vst [vmem:[%s501 + $0xb8] sm:$0xff] %v620
              %v622 = vld [vmem:[%s500 + $0x78] sm:$0xff]
              %623 = vst [vmem:[%s501 + $0xc0] sm:$0xff] %v622
              %v624 = vld [vmem:[%s500 + $0x80] sm:$0xff]
              %625 = vst [vmem:[%s501 + $0xc8] sm:$0xff] %v624
              %v626 = vld [vmem:[%s500 + $0x88] sm:$0xff]
              %627 = vst [vmem:[%s501 + $0xd0] sm:$0xff] %v626
              %v628 = vld [vmem:[%s500 + $0x90] sm:$0xff]
              %629 = vst [vmem:[%s501 + $0xd8] sm:$0xff] %v628
              %s630 = sadd.s32 1, %s499
              %p631 = scmp.ge.s32.totalorder %s630, %s490
              %s632 = scalar_select %p631, 0, %s630
              %s633 = smul.u32 %s632, 128
              %s634 = smul.u32 %s632, 128
              %s635 = scalar_lea.vmem %s455, %s633
              %s636 = scalar_lea.vmem [#allocation4], %s634
            $region99: #{tpu_custom_call.1} parent=93 // loop_footer
              %s496 = sadd.s32 %s494, 1
            $region100: #{tpu_custom_call.1} parent=93 // loop_footer_branch
              %493 = sbr.rel target = $region96
            $region101: #{tpu_custom_call.1} parent=93 // loop_exit
              _
            %s637 = sshrl.u32 %s489, 4
            %s638 = sand.u32 %s489, 15
            %s639 = smul.u32 %s637, 16
            %s640 = smul.u32 128, %s639
            %s641 = sshra.s32 %s640, 4
            %s642 = scalar_lea.vmem %s455, %s641
            %s643 = smul.u32 128, %s639
            %s644 = sshra.s32 %s643, 4
            %s645 = scalar_lea.vmem [#allocation4], %s644
            // While loop
            $region102: #{tpu_custom_call.1} parent=93 // loop_pre_header
              _
            $region103: #{tpu_custom_call.1} parent=93 // loop_header
              %s649 = sphi 0, %s651
              %p650 = scmp.ge.s32.totalorder %s649, %s638
              %s654 = sphi 0, %s667
              %s655 = sphi %s642, %s670
              %s656 = sphi %s645, %s671
            $region104: #{tpu_custom_call.1} parent=93 // loop_header_branch
              %653 = sbr.rel (%p650) target = $region108
            $region105: #{tpu_custom_call.1} parent=93 // loop_body
              %v657 = vld [vmem:[%s655] sm:$0xff]
              %658 = vst [vmem:[%s656] sm:$0xff] %v657
              %v659 = vld [vmem:[%s655 + $0x8] sm:$0xff]
              %660 = vst [vmem:[%s656 + $0x20] sm:$0xff] %v659
              %v661 = vld [vmem:[%s655 + $0x10] sm:$0xff]
              %662 = vst [vmem:[%s656 + $0x40] sm:$0xff] %v661
              %v663 = vld [vmem:[%s655 + $0x18] sm:$0xff]
              %664 = vst [vmem:[%s656 + $0x60] sm:$0xff] %v663
              %s665 = sadd.s32 1, %s654
              %p666 = scmp.ge.s32.totalorder %s665, %s638
              %s667 = scalar_select %p666, 0, %s665
              %s668 = smul.u32 %s667, 8
              %s669 = smul.u32 %s667, 8
              %s670 = scalar_lea.vmem %s642, %s668
              %s671 = scalar_lea.vmem %s645, %s669 [#allocation4]
            $region106: #{tpu_custom_call.1} parent=93 // loop_footer
              %s651 = sadd.s32 %s649, 1
            $region107: #{tpu_custom_call.1} parent=93 // loop_footer_branch
              %648 = sbr.rel target = $region103
            $region108: #{tpu_custom_call.1} parent=93 // loop_exit
              _
          $region94: #{tpu_custom_call.1} parent=78 // pred_fallthru
            _
          %p672 = pneg %p485
          // Predicated region
          $region109: #{tpu_custom_call.1} parent=78 // pred_check
            _
          $region110: #{tpu_custom_call.1} parent=78 // pred_check_branch
            %674 = sbr.rel (%p485) target = $region112
          $region111: #{tpu_custom_call.1} parent=78 // pred_region
            %s675 = sand.u32 %s456, 7
            %s676 = ssub.s32 %s456, %s675
            %s677 = scalar_lea.vmem %s455, %s676
            %s678 = ssub.s32 %s456, %s675
            %s679 = scalar_lea.vmem [#allocation4], %s678
            %s680 = sshrl.u32 %s456, 3
            %s681 = sshrl.u32 %s680, 4
            // While loop
            $region113: #{tpu_custom_call.1} parent=111 // loop_pre_header
              _
            $region114: #{tpu_custom_call.1} parent=111 // loop_header
              %s685 = sphi 0, %s687
              %p686 = scmp.ge.s32.totalorder %s685, %s681
              %s690 = sphi 0, %s823
              %s691 = sphi %s455, %s826
              %s692 = sphi [#allocation4], %s827
            $region115: #{tpu_custom_call.1} parent=111 // loop_header_branch
              %689 = sbr.rel (%p686) target = $region119
            $region116: #{tpu_custom_call.1} parent=111 // loop_body
              %v693 = vld [vmem:[%s691] sm:$0xff]
              %694 = vst [vmem:[%s692] sm:$0xff] %v693
              %v695 = vld [vmem:[%s691 + $0x8] sm:$0xff]
              %696 = vst [vmem:[%s692 + $0x8] sm:$0xff] %v695
              %v697 = vld [vmem:[%s691 + $0x10] sm:$0xff]
              %698 = vst [vmem:[%s692 + $0x10] sm:$0xff] %v697
              %v699 = vld [vmem:[%s691 + $0x18] sm:$0xff]
              %700 = vst [vmem:[%s692 + $0x18] sm:$0xff] %v699
              %v701 = vld [vmem:[%s691 + $0x20] sm:$0xff]
              %702 = vst [vmem:[%s692 + $0x20] sm:$0xff] %v701
              %v703 = vld [vmem:[%s691 + $0x28] sm:$0xff]
              %704 = vst [vmem:[%s692 + $0x28] sm:$0xff] %v703
              %v705 = vld [vmem:[%s691 + $0x30] sm:$0xff]
              %706 = vst [vmem:[%s692 + $0x30] sm:$0xff] %v705
              %v707 = vld [vmem:[%s691 + $0x38] sm:$0xff]
              %708 = vst [vmem:[%s692 + $0x38] sm:$0xff] %v707
              %v709 = vld [vmem:[%s691 + $0x40] sm:$0xff]
              %710 = vst [vmem:[%s692 + $0x40] sm:$0xff] %v709
              %v711 = vld [vmem:[%s691 + $0x48] sm:$0xff]
              %712 = vst [vmem:[%s692 + $0x48] sm:$0xff] %v711
              %v713 = vld [vmem:[%s691 + $0x50] sm:$0xff]
              %714 = vst [vmem:[%s692 + $0x50] sm:$0xff] %v713
              %v715 = vld [vmem:[%s691 + $0x58] sm:$0xff]
              %716 = vst [vmem:[%s692 + $0x58] sm:$0xff] %v715
              %v717 = vld [vmem:[%s691 + $0x60] sm:$0xff]
              %718 = vst [vmem:[%s692 + $0x60] sm:$0xff] %v717
              %v719 = vld [vmem:[%s691 + $0x68] sm:$0xff]
              %720 = vst [vmem:[%s692 + $0x68] sm:$0xff] %v719
              %v721 = vld [vmem:[%s691 + $0x70] sm:$0xff]
              %722 = vst [vmem:[%s692 + $0x70] sm:$0xff] %v721
              %v723 = vld [vmem:[%s691 + $0x78] sm:$0xff]
              %724 = vst [vmem:[%s692 + $0x78] sm:$0xff] %v723
              %v725 = vld [vmem:[%s691 + $0x8] sm:$0xff]
              %726 = vst [vmem:[%s692 + $0x20] sm:$0xff] %v725
              %v727 = vld [vmem:[%s691 + $0x10] sm:$0xff]
              %728 = vst [vmem:[%s692 + $0x28] sm:$0xff] %v727
              %v729 = vld [vmem:[%s691 + $0x18] sm:$0xff]
              %730 = vst [vmem:[%s692 + $0x30] sm:$0xff] %v729
              %v731 = vld [vmem:[%s691 + $0x20] sm:$0xff]
              %732 = vst [vmem:[%s692 + $0x38] sm:$0xff] %v731
              %v733 = vld [vmem:[%s691 + $0x28] sm:$0xff]
              %734 = vst [vmem:[%s692 + $0x40] sm:$0xff] %v733
              %v735 = vld [vmem:[%s691 + $0x30] sm:$0xff]
              %736 = vst [vmem:[%s692 + $0x48] sm:$0xff] %v735
              %v737 = vld [vmem:[%s691 + $0x38] sm:$0xff]
              %738 = vst [vmem:[%s692 + $0x50] sm:$0xff] %v737
              %v739 = vld [vmem:[%s691 + $0x40] sm:$0xff]
              %740 = vst [vmem:[%s692 + $0x58] sm:$0xff] %v739
              %v741 = vld [vmem:[%s691 + $0x48] sm:$0xff]
              %742 = vst [vmem:[%s692 + $0x60] sm:$0xff] %v741
              %v743 = vld [vmem:[%s691 + $0x50] sm:$0xff]
              %744 = vst [vmem:[%s692 + $0x68] sm:$0xff] %v743
              %v745 = vld [vmem:[%s691 + $0x58] sm:$0xff]
              %746 = vst [vmem:[%s692 + $0x70] sm:$0xff] %v745
              %v747 = vld [vmem:[%s691 + $0x60] sm:$0xff]
              %748 = vst [vmem:[%s692 + $0x78] sm:$0xff] %v747
              %v749 = vld [vmem:[%s691 + $0x68] sm:$0xff]
              %750 = vst [vmem:[%s692 + $0x80] sm:$0xff] %v749
              %v751 = vld [vmem:[%s691 + $0x70] sm:$0xff]
              %752 = vst [vmem:[%s692 + $0x88] sm:$0xff] %v751
              %v753 = vld [vmem:[%s691 + $0x78] sm:$0xff]
              %754 = vst [vmem:[%s692 + $0x90] sm:$0xff] %v753
              %v755 = vld [vmem:[%s691 + $0x80] sm:$0xff]
              %756 = vst [vmem:[%s692 + $0x98] sm:$0xff] %v755
              %v757 = vld [vmem:[%s691 + $0x10] sm:$0xff]
              %758 = vst [vmem:[%s692 + $0x40] sm:$0xff] %v757
              %v759 = vld [vmem:[%s691 + $0x18] sm:$0xff]
              %760 = vst [vmem:[%s692 + $0x48] sm:$0xff] %v759
              %v761 = vld [vmem:[%s691 + $0x20] sm:$0xff]
              %762 = vst [vmem:[%s692 + $0x50] sm:$0xff] %v761
              %v763 = vld [vmem:[%s691 + $0x28] sm:$0xff]
              %764 = vst [vmem:[%s692 + $0x58] sm:$0xff] %v763
              %v765 = vld [vmem:[%s691 + $0x30] sm:$0xff]
              %766 = vst [vmem:[%s692 + $0x60] sm:$0xff] %v765
              %v767 = vld [vmem:[%s691 + $0x38] sm:$0xff]
              %768 = vst [vmem:[%s692 + $0x68] sm:$0xff] %v767
              %v769 = vld [vmem:[%s691 + $0x40] sm:$0xff]
              %770 = vst [vmem:[%s692 + $0x70] sm:$0xff] %v769
              %v771 = vld [vmem:[%s691 + $0x48] sm:$0xff]
              %772 = vst [vmem:[%s692 + $0x78] sm:$0xff] %v771
              %v773 = vld [vmem:[%s691 + $0x50] sm:$0xff]
              %774 = vst [vmem:[%s692 + $0x80] sm:$0xff] %v773
              %v775 = vld [vmem:[%s691 + $0x58] sm:$0xff]
              %776 = vst [vmem:[%s692 + $0x88] sm:$0xff] %v775
              %v777 = vld [vmem:[%s691 + $0x60] sm:$0xff]
              %778 = vst [vmem:[%s692 + $0x90] sm:$0xff] %v777
              %v779 = vld [vmem:[%s691 + $0x68] sm:$0xff]
              %780 = vst [vmem:[%s692 + $0x98] sm:$0xff] %v779
              %v781 = vld [vmem:[%s691 + $0x70] sm:$0xff]
              %782 = vst [vmem:[%s692 + $0xa0] sm:$0xff] %v781
              %v783 = vld [vmem:[%s691 + $0x78] sm:$0xff]
              %784 = vst [vmem:[%s692 + $0xa8] sm:$0xff] %v783
              %v785 = vld [vmem:[%s691 + $0x80] sm:$0xff]
              %786 = vst [vmem:[%s692 + $0xb0] sm:$0xff] %v785
              %v787 = vld [vmem:[%s691 + $0x88] sm:$0xff]
              %788 = vst [vmem:[%s692 + $0xb8] sm:$0xff] %v787
              %v789 = vld [vmem:[%s691 + $0x18] sm:$0xff]
              %790 = vst [vmem:[%s692 + $0x60] sm:$0xff] %v789
              %v791 = vld [vmem:[%s691 + $0x20] sm:$0xff]
              %792 = vst [vmem:[%s692 + $0x68] sm:$0xff] %v791
              %v793 = vld [vmem:[%s691 + $0x28] sm:$0xff]
              %794 = vst [vmem:[%s692 + $0x70] sm:$0xff] %v793
              %v795 = vld [vmem:[%s691 + $0x30] sm:$0xff]
              %796 = vst [vmem:[%s692 + $0x78] sm:$0xff] %v795
              %v797 = vld [vmem:[%s691 + $0x38] sm:$0xff]
              %798 = vst [vmem:[%s692 + $0x80] sm:$0xff] %v797
              %v799 = vld [vmem:[%s691 + $0x40] sm:$0xff]
              %800 = vst [vmem:[%s692 + $0x88] sm:$0xff] %v799
              %v801 = vld [vmem:[%s691 + $0x48] sm:$0xff]
              %802 = vst [vmem:[%s692 + $0x90] sm:$0xff] %v801
              %v803 = vld [vmem:[%s691 + $0x50] sm:$0xff]
              %804 = vst [vmem:[%s692 + $0x98] sm:$0xff] %v803
              %v805 = vld [vmem:[%s691 + $0x58] sm:$0xff]
              %806 = vst [vmem:[%s692 + $0xa0] sm:$0xff] %v805
              %v807 = vld [vmem:[%s691 + $0x60] sm:$0xff]
              %808 = vst [vmem:[%s692 + $0xa8] sm:$0xff] %v807
              %v809 = vld [vmem:[%s691 + $0x68] sm:$0xff]
              %810 = vst [vmem:[%s692 + $0xb0] sm:$0xff] %v809
              %v811 = vld [vmem:[%s691 + $0x70] sm:$0xff]
              %812 = vst [vmem:[%s692 + $0xb8] sm:$0xff] %v811
              %v813 = vld [vmem:[%s691 + $0x78] sm:$0xff]
              %814 = vst [vmem:[%s692 + $0xc0] sm:$0xff] %v813
              %v815 = vld [vmem:[%s691 + $0x80] sm:$0xff]
              %816 = vst [vmem:[%s692 + $0xc8] sm:$0xff] %v815
              %v817 = vld [vmem:[%s691 + $0x88] sm:$0xff]
              %818 = vst [vmem:[%s692 + $0xd0] sm:$0xff] %v817
              %v819 = vld [vmem:[%s691 + $0x90] sm:$0xff]
              %820 = vst [vmem:[%s692 + $0xd8] sm:$0xff] %v819
              %s821 = sadd.s32 1, %s690
              %p822 = scmp.ge.s32.totalorder %s821, %s681
              %s823 = scalar_select %p822, 0, %s821
              %s824 = smul.u32 %s823, 128
              %s825 = smul.u32 %s823, 128
              %s826 = scalar_lea.vmem %s455, %s824
              %s827 = scalar_lea.vmem [#allocation4], %s825
            $region117: #{tpu_custom_call.1} parent=111 // loop_footer
              %s687 = sadd.s32 %s685, 1
            $region118: #{tpu_custom_call.1} parent=111 // loop_footer_branch
              %684 = sbr.rel target = $region114
            $region119: #{tpu_custom_call.1} parent=111 // loop_exit
              _
            %s828 = sshrl.u32 %s680, 4
            %s829 = sand.u32 %s680, 15
            %s830 = smul.u32 %s828, 16
            %s831 = smul.u32 128, %s830
            %s832 = sshra.s32 %s831, 4
            %s833 = scalar_lea.vmem %s455, %s832
            %s834 = smul.u32 128, %s830
            %s835 = sshra.s32 %s834, 4
            %s836 = scalar_lea.vmem [#allocation4], %s835
            // While loop
            $region120: #{tpu_custom_call.1} parent=111 // loop_pre_header
              _
            $region121: #{tpu_custom_call.1} parent=111 // loop_header
              %s840 = sphi 0, %s842
              %p841 = scmp.ge.s32.totalorder %s840, %s829
              %s845 = sphi 0, %s858
              %s846 = sphi %s833, %s861
              %s847 = sphi %s836, %s862
            $region122: #{tpu_custom_call.1} parent=111 // loop_header_branch
              %844 = sbr.rel (%p841) target = $region126
            $region123: #{tpu_custom_call.1} parent=111 // loop_body
              %v848 = vld [vmem:[%s846] sm:$0xff]
              %849 = vst [vmem:[%s847] sm:$0xff] %v848
              %v850 = vld [vmem:[%s846 + $0x8] sm:$0xff]
              %851 = vst [vmem:[%s847 + $0x20] sm:$0xff] %v850
              %v852 = vld [vmem:[%s846 + $0x10] sm:$0xff]
              %853 = vst [vmem:[%s847 + $0x40] sm:$0xff] %v852
              %v854 = vld [vmem:[%s846 + $0x18] sm:$0xff]
              %855 = vst [vmem:[%s847 + $0x60] sm:$0xff] %v854
              %s856 = sadd.s32 1, %s845
              %p857 = scmp.ge.s32.totalorder %s856, %s829
              %s858 = scalar_select %p857, 0, %s856
              %s859 = smul.u32 %s858, 8
              %s860 = smul.u32 %s858, 8
              %s861 = scalar_lea.vmem %s833, %s859
              %s862 = scalar_lea.vmem %s836, %s860 [#allocation4]
            $region124: #{tpu_custom_call.1} parent=111 // loop_footer
              %s842 = sadd.s32 %s840, 1
            $region125: #{tpu_custom_call.1} parent=111 // loop_footer_branch
              %839 = sbr.rel target = $region121
            $region126: #{tpu_custom_call.1} parent=111 // loop_exit
              _
            %s863 = sshllo.u32 0, %s675
            loop: start=0, step=1, limit=1
            $region127: #{tpu_custom_call.1} parent=111 // loop_pre_header
              _
            $region128: #{tpu_custom_call.1} parent=111 // loop_header
              %s865 = sphi 0, %s869
              %p866 = scmp.ge.s32.totalorder %s865, 1
              %s870 = sphi %s677, %s677
              %s871 = sphi %s679, %s679
            $region129: #{tpu_custom_call.1} parent=111 // loop_header_branch
              %868 = sbr.rel (%p866) target = $region133
            $region130: #{tpu_custom_call.1} parent=111 // loop_body
              %v872 = vld [vmem:[%s870] sm:%s863]
              %873 = vst [vmem:[%s871] sm:%s863] %v872
              %v874 = vld [vmem:[%s870 + $0x8] sm:%s863]
              %875 = vst [vmem:[%s871 + $0x20] sm:%s863] %v874
              %v876 = vld [vmem:[%s870 + $0x10] sm:%s863]
              %877 = vst [vmem:[%s871 + $0x40] sm:%s863] %v876
              %v878 = vld [vmem:[%s870 + $0x18] sm:%s863]
              %879 = vst [vmem:[%s871 + $0x60] sm:%s863] %v878
            $region131: #{tpu_custom_call.1} parent=111 // loop_footer
              %s869 = sadd.s32 1, %s865
            $region132: #{tpu_custom_call.1} parent=111 // loop_footer_branch
              %864 = sbr.rel target = $region128
            $region133: #{tpu_custom_call.1} parent=111 // loop_exit
              _
          $region112: #{tpu_custom_call.1} parent=78 // pred_fallthru
            _
        $region79: #{tpu_custom_call.1} parent=74 // pred_fallthru
          _
        // Predicated region
        $region80: #{tpu_custom_call.1} parent=74 // pred_check
          %p464 = pneg %p460
        $region81: #{tpu_custom_call.1} parent=74 // pred_check_branch
          %466 = sbr.rel (%p464) target = $region83
        $region82: #{tpu_custom_call.1} parent=74 // pred_region
          %s467 = sshllo.u32 0, %s456
          loop: start=0, step=1, limit=1
          $region84: #{tpu_custom_call.1} parent=82 // loop_pre_header
            _
          $region85: #{tpu_custom_call.1} parent=82 // loop_header
            %s469 = sphi 0, %s473
            %p470 = scmp.ge.s32.totalorder %s469, 1
            %s474 = sphi %s455, %s455
            %s475 = sphi [#allocation4], [#allocation4]
          $region86: #{tpu_custom_call.1} parent=82 // loop_header_branch
            %472 = sbr.rel (%p470) target = $region90
          $region87: #{tpu_custom_call.1} parent=82 // loop_body
            %v476 = vld [vmem:[%s474] sm:%s467]
            %477 = vst [vmem:[%s475] sm:%s467] %v476
            %v478 = vld [vmem:[%s474 + $0x8] sm:%s467]
            %479 = vst [vmem:[%s475 + $0x20] sm:%s467] %v478
            %v480 = vld [vmem:[%s474 + $0x10] sm:%s467]
            %481 = vst [vmem:[%s475 + $0x40] sm:%s467] %v480
            %v482 = vld [vmem:[%s474 + $0x18] sm:%s467]
            %483 = vst [vmem:[%s475 + $0x60] sm:%s467] %v482
          $region88: #{tpu_custom_call.1} parent=82 // loop_footer
            %s473 = sadd.s32 1, %s469
          $region89: #{tpu_custom_call.1} parent=82 // loop_footer_branch
            %468 = sbr.rel target = $region85
          $region90: #{tpu_custom_call.1} parent=82 // loop_exit
            _
        $region83: #{tpu_custom_call.1} parent=74 // pred_fallthru
          _
      $region75: #{tpu_custom_call.1} parent=70 // pred_fallthru
        _
      %880 = vnop
    $region71: #{tpu_custom_call.1} parent=1 // pred_fallthru
      _
    // Predicated region
    $region134: #{tpu_custom_call.1} parent=1 // pred_check
      _
    $region135: #{tpu_custom_call.1} parent=1 // pred_check_branch
      %882 = sbr.rel (0) target = $region137
    $region136: #{tpu_custom_call.1} parent=1 // pred_region
      %s883 = sadd.s32 0, 0
      %p884 = scmp.lt.s32.totalorder %s883, 0
      %s885 = scalar_select %p884, %s883, 0
      %s886 = smul.u32 4, %s885
      %s887 = ssub.s32 1, %s886
      %s888 = smul.u32 16, %s887
      %p889 = scmp.lt.s32.totalorder %s886, 0
      %s890 = scalar_select %p889, %s886, 0
      %s891 = scalar_lea.vmem %s2, %s890
      %s892 = sadd.s32 0, 0
      %p893 = scmp.lt.s32.totalorder %s892, 0
      %s894 = scalar_select %p893, %s892, 0
      %s895 = smul.u32 4, %s894
      %s896 = ssub.s32 1, %s895
      %s897 = smul.u32 16, %s896
    $region137: #{tpu_custom_call.1} parent=1 // pred_fallthru
      _
    // Predicated region
    $region138: #{tpu_custom_call.1} parent=1 // pred_check
      _
    $region139: #{tpu_custom_call.1} parent=1 // pred_check_branch
      %899 = sbr.rel (0) target = $region141
    $region140: #{tpu_custom_call.1} parent=1 // pred_region
      _
    $region141: #{tpu_custom_call.1} parent=1 // pred_fallthru
      _
    // Predicated region
    $region142: #{tpu_custom_call.1} parent=1 // pred_check
      _
    $region143: #{tpu_custom_call.1} parent=1 // pred_check_branch
      %901 = sbr.rel (0) target = $region145
    $region144: #{tpu_custom_call.1} parent=1 // pred_region
      _
    $region145: #{tpu_custom_call.1} parent=1 // pred_fallthru
      _
    %s902 = sadd.s32 0, 0
    %p903 = scmp.lt.s32.totalorder %s902, 0
    %s904 = scalar_select %p903, %s902, 0
    %s905 = smul.u32 4, %s904
    %s906 = ssub.s32 1, %s905
    %s907 = smul.u32 16, %s906
    %p908 = scmp.lt.s32.totalorder %s905, 0
    %s909 = scalar_select %p908, %s905, 0
    %s910 = scalar_lea.vmem %s2, %s909
    %s911 = sadd.s32 0, 0
    %p912 = scmp.lt.s32.totalorder %s911, 0
    %s913 = scalar_select %p912, %s911, 0
    %s914 = smul.u32 4, %s913
    %s915 = ssub.s32 1, %s914
    %s916 = smul.u32 512, %s915
    %s917 = sadd.s32 0, 0
    %p918 = scmp.lt.s32.totalorder %s917, 0
    %s919 = scalar_select %p918, %s917, 0
    %s920 = smul.u32 4, %s919
    %s921 = ssub.s32 1, %s920
    %s922 = smul.u32 512, %s921
    %s923 = sadd.s32 0, 0
    %p924 = scmp.lt.s32.totalorder %s923, 0
    %s925 = scalar_select %p924, %s923, 0
    %s926 = smul.u32 4, %s925
    %s927 = ssub.s32 1, %s926
    %s928 = smul.u32 16, %s927
    %p929 = scmp.lt.s32.totalorder %s926, 0
    %s930 = scalar_select %p929, %s926, 0
    %s931 = scalar_lea.vmem %s2, %s930
    %s932 = sadd.s32 0, 0
    %p933 = scmp.lt.s32.totalorder %s932, 0
    %s934 = scalar_select %p933, %s932, 0
    %s935 = smul.u32 4, %s934
    %s936 = ssub.s32 1, %s935
    %s937 = smul.u32 16, %s936
    %p938 = scmp.eq.s32.totalorder 0, 0
    // Predicated region
    $region146: #{tpu_custom_call.1} parent=1 // pred_check
      %p939 = pneg %p938
    $region147: #{tpu_custom_call.1} parent=1 // pred_check_branch
      %941 = sbr.rel (%p939) target = $region149
    $region148: #{tpu_custom_call.1} parent=1 // pred_region
      %v942 = vlaneseq
      %vm943 = vcmp.ge.s32.totalorder %v942, 0
      %vm944 = vcmp.lt.s32.totalorder %v942, 512
      %vm945 = vmand %vm943, %vm944
      %946 = vst.msk [vmem:[#allocation2] sm:$0xf] %vm945, 0.0
    $region149: #{tpu_custom_call.1} parent=1 // pred_fallthru
      _
    %v947 = vld [vmem:[#allocation3] sm:$0xff]
    %v948 = vld [vmem:[#allocation3 + $0x8] sm:$0xff]
    %v949 = vld [vmem:[#allocation3 + $0x10] sm:$0xff]
    %v950 = vld [vmem:[#allocation3 + $0x18] sm:$0xff]
    %v951 = vld [vmem:[#allocation3 + $0x20] sm:$0xff]
    %v952 = vld [vmem:[#allocation3 + $0x28] sm:$0xff]
    %v953 = vld [vmem:[#allocation3 + $0x30] sm:$0xff]
    %v954 = vld [vmem:[#allocation3 + $0x38] sm:$0xff]
    %v955 = vld [vmem:[#allocation3 + $0x40] sm:$0xff]
    %v956 = vld [vmem:[#allocation3 + $0x48] sm:$0xff]
    %v957 = vld [vmem:[#allocation3 + $0x50] sm:$0xff]
    %v958 = vld [vmem:[#allocation3 + $0x58] sm:$0xff]
    %v959 = vld [vmem:[#allocation3 + $0x60] sm:$0xff]
    %v960 = vld [vmem:[#allocation3 + $0x68] sm:$0xff]
    %v961 = vld [vmem:[#allocation3 + $0x70] sm:$0xff]
    %v962 = vld [vmem:[#allocation3 + $0x78] sm:$0xff]
    %v963 = vld [vmem:[#allocation4] sm:$0xff]
    %v964 = vld [vmem:[#allocation4 + $0x8] sm:$0xff]
    %v965 = vld [vmem:[#allocation4 + $0x10] sm:$0xff]
    %v966 = vld [vmem:[#allocation4 + $0x18] sm:$0xff]
    %v967 = vld [vmem:[#allocation4 + $0x20] sm:$0xff]
    %v968 = vld [vmem:[#allocation4 + $0x28] sm:$0xff]
    %v969 = vld [vmem:[#allocation4 + $0x30] sm:$0xff]
    %v970 = vld [vmem:[#allocation4 + $0x38] sm:$0xff]
    %v971 = vld [vmem:[#allocation4 + $0x40] sm:$0xff]
    %v972 = vld [vmem:[#allocation4 + $0x48] sm:$0xff]
    %v973 = vld [vmem:[#allocation4 + $0x50] sm:$0xff]
    %v974 = vld [vmem:[#allocation4 + $0x58] sm:$0xff]
    %v975 = vld [vmem:[#allocation4 + $0x60] sm:$0xff]
    %v976 = vld [vmem:[#allocation4 + $0x68] sm:$0xff]
    %v977 = vld [vmem:[#allocation4 + $0x70] sm:$0xff]
    %v978 = vld [vmem:[#allocation4 + $0x78] sm:$0xff]
    %v979 = vsub.f32 %v947, %v963
    %v980 = vsub.f32 %v948, %v964
    %v981 = vsub.f32 %v949, %v965
    %v982 = vsub.f32 %v950, %v966
    %v983 = vsub.f32 %v951, %v967
    %v984 = vsub.f32 %v952, %v968
    %v985 = vsub.f32 %v953, %v969
    %v986 = vsub.f32 %v954, %v970
    %v987 = vsub.f32 %v955, %v971
    %v988 = vsub.f32 %v956, %v972
    %v989 = vsub.f32 %v957, %v973
    %v990 = vsub.f32 %v958, %v974
    %v991 = vsub.f32 %v959, %v975
    %v992 = vsub.f32 %v960, %v976
    %v993 = vsub.f32 %v961, %v977
    %v994 = vsub.f32 %v962, %v978
    %v995 = vmul.f32 %v979, %v979
    %v996 = vmul.f32 %v980, %v980
    %v997 = vmul.f32 %v981, %v981
    %v998 = vmul.f32 %v982, %v982
    %v999 = vmul.f32 %v983, %v983
    %v1000 = vmul.f32 %v984, %v984
    %v1001 = vmul.f32 %v985, %v985
    %v1002 = vmul.f32 %v986, %v986
    %v1003 = vmul.f32 %v987, %v987
    %v1004 = vmul.f32 %v988, %v988
    %v1005 = vmul.f32 %v989, %v989
    %v1006 = vmul.f32 %v990, %v990
    %v1007 = vmul.f32 %v991, %v991
    %v1008 = vmul.f32 %v992, %v992
    %v1009 = vmul.f32 %v993, %v993
    %v1010 = vmul.f32 %v994, %v994
    %v1011 = vadd.f32 %v995, %v999
    %v1012 = vadd.f32 %v1011, %v1003
    %v1013 = vadd.f32 %v1012, %v1007
    %v1014 = vrot.slane %v1013, 4
    %v1015 = vadd.f32 %v1013, %v1014
    %v1016 = vrot.slane %v1015, 2
    %v1017 = vadd.f32 %v1015, %v1016
    %v1018 = vrot.slane %v1017, 1
    %v1019 = vadd.f32 %v1017, %v1018
    %v1020 = vadd.f32 %v996, %v1000
    %v1021 = vadd.f32 %v1020, %v1004
    %v1022 = vadd.f32 %v1021, %v1008
    %v1023 = vrot.slane %v1022, 4
    %v1024 = vadd.f32 %v1022, %v1023
    %v1025 = vrot.slane %v1024, 2
    %v1026 = vadd.f32 %v1024, %v1025
    %v1027 = vrot.slane %v1026, 1
    %v1028 = vadd.f32 %v1026, %v1027
    %v1029 = vadd.f32 %v997, %v1001
    %v1030 = vadd.f32 %v1029, %v1005
    %v1031 = vadd.f32 %v1030, %v1009
    %v1032 = vrot.slane %v1031, 4
    %v1033 = vadd.f32 %v1031, %v1032
    %v1034 = vrot.slane %v1033, 2
    %v1035 = vadd.f32 %v1033, %v1034
    %v1036 = vrot.slane %v1035, 1
    %v1037 = vadd.f32 %v1035, %v1036
    %v1038 = vadd.f32 %v998, %v1002
    %v1039 = vadd.f32 %v1038, %v1006
    %v1040 = vadd.f32 %v1039, %v1010
    %v1041 = vrot.slane %v1040, 4
    %v1042 = vadd.f32 %v1040, %v1041
    %v1043 = vrot.slane %v1042, 2
    %v1044 = vadd.f32 %v1042, %v1043
    %v1045 = vrot.slane %v1044, 1
    %v1046 = vadd.f32 %v1044, %v1045
    %v1047 = vrsqrt.pop %v1019
    %v1048 = vmul.f32 %v1019, %v1047
    %vm1049 = vcmp.eq.f32.partialorder %v1019, inf
    %v1050 = vsel %vm1049, %v1019, %v1048
    %vm1051 = vcmp.eq.f32.partialorder %v1019, 0.0
    %v1052 = vand.u32 %v1019, 2147483648
    %v1053 = vsel %vm1051, %v1052, %v1050
    %v1054 = vrsqrt.pop %v1028
    %v1055 = vmul.f32 %v1028, %v1054
    %vm1056 = vcmp.eq.f32.partialorder %v1028, inf
    %v1057 = vsel %vm1056, %v1028, %v1055
    %vm1058 = vcmp.eq.f32.partialorder %v1028, 0.0
    %v1059 = vand.u32 %v1028, 2147483648
    %v1060 = vsel %vm1058, %v1059, %v1057
    %v1061 = vrsqrt.pop %v1037
    %v1062 = vmul.f32 %v1037, %v1061
    %vm1063 = vcmp.eq.f32.partialorder %v1037, inf
    %v1064 = vsel %vm1063, %v1037, %v1062
    %vm1065 = vcmp.eq.f32.partialorder %v1037, 0.0
    %v1066 = vand.u32 %v1037, 2147483648
    %v1067 = vsel %vm1065, %v1066, %v1064
    %v1068 = vrsqrt.pop %v1046
    %v1069 = vmul.f32 %v1046, %v1068
    %vm1070 = vcmp.eq.f32.partialorder %v1046, inf
    %v1071 = vsel %vm1070, %v1046, %v1069
    %vm1072 = vcmp.eq.f32.partialorder %v1046, 0.0
    %v1073 = vand.u32 %v1046, 2147483648
    %v1074 = vsel %vm1072, %v1073, %v1071
    %v1075 = vld [vmem:[%s931] sm:$0xf]
    %v1076 = vsub.f32 1.0, %v1075
    %v1077 = vmul.f32 %v1076, 0.6666667
    %v1082 = vcombine.low %v1019, %v1028
    %v1083 = vcombine.low %v1037, %v1046
    %v1085 = vunpack.c.l.s4 1966171168
    %v1086 = vunpack.c.0.s8 %v1085
    %v1087 = vlaneseq
    %v1088 = vshrl.u32 %v1087, 7
    %v1089 = vsub.s32 %v1086, %v1088
    %v1090 = vrot.slane %v1082, %v1089
    %v1092 = vunpack.c.l.s4 1966171168
    %v1093 = vunpack.c.0.s8 %v1092
    %v1094 = vlaneseq
    %v1095 = vshrl.u32 %v1094, 7
    %v1096 = vsub.s32 %v1093, %v1095
    %v1097 = vrot.slane %v1083, %v1096
    %v1098 = vcombine.low %v1090, %v1097
    %v1100 = vunpack.c.l.s4 1966171168
    %v1101 = vunpack.c.0.s8 %v1100
    %v1102 = vlaneseq
    %v1103 = vshrl.u32 %v1102, 7
    %v1104 = vsub.s32 %v1101, %v1103
    %v1105 = vrot.slane %v1098, %v1104
    %v1107 = vmul.f32 %v1077, %v1105
    %v1108 = vmul.f32 %v1075, 6.0
    %v1109 = vmul.f32 %v1053, -0.92333335
    %v1110 = vmul.f32 %v1060, -0.92333335
    %v1111 = vmul.f32 %v1067, -0.92333335
    %v1112 = vmul.f32 %v1074, -0.92333335
    %v1113 = vmul.f32 %v1109, 1.442695
    %v1114 = vpow.pop %v1113
    %v1115 = vmul.f32 %v1110, 1.442695
    %v1116 = vpow.pop %v1115
    %v1117 = vmul.f32 %v1111, 1.442695
    %v1118 = vpow.pop %v1117
    %v1119 = vmul.f32 %v1112, 1.442695
    %v1120 = vpow.pop %v1119
    %v1125 = vcombine.low %v1114, %v1116
    %v1126 = vcombine.low %v1118, %v1120
    %v1128 = vunpack.c.l.s4 1966171168
    %v1129 = vunpack.c.0.s8 %v1128
    %v1130 = vlaneseq
    %v1131 = vshrl.u32 %v1130, 7
    %v1132 = vsub.s32 %v1129, %v1131
    %v1133 = vrot.slane %v1125, %v1132
    %v1135 = vunpack.c.l.s4 1966171168
    %v1136 = vunpack.c.0.s8 %v1135
    %v1137 = vlaneseq
    %v1138 = vshrl.u32 %v1137, 7
    %v1139 = vsub.s32 %v1136, %v1138
    %v1140 = vrot.slane %v1126, %v1139
    %v1141 = vcombine.low %v1133, %v1140
    %v1143 = vunpack.c.l.s4 1966171168
    %v1144 = vunpack.c.0.s8 %v1143
    %v1145 = vlaneseq
    %v1146 = vshrl.u32 %v1145, 7
    %v1147 = vsub.s32 %v1144, %v1146
    %v1148 = vrot.slane %v1141, %v1147
    %v1150 = vmul.f32 %v1108, %v1148
    %v1151 = vadd.f32 %v1107, %v1150
    %s1152 = sadd.s32 0, 0
    %s1153 = smul.u32 %s1152, 512
    %v1154 = vlaneseq
    %v1155 = vand.u32 %v1154, 127
    %v1156 = vadd.s32 %v1155, 128
    %v1157 = vadd.s32 %v1155, 256
    %v1158 = vadd.s32 %v1155, 384
    %v1159 = vstv %s1153
    %v1160 = vadd.s32 %v1159, %v1155
    %v1161 = vadd.s32 %v1159, %v1156
    %v1162 = vadd.s32 %v1159, %v1157
    %v1163 = vadd.s32 %v1159, %v1158
    %vm1164 = vcmp.lt.s32.totalorder %v1160, 8
    %vm1165 = vcmp.lt.s32.totalorder %v1161, 8
    %vm1166 = vcmp.lt.s32.totalorder %v1162, 8
    %vm1167 = vcmp.lt.s32.totalorder %v1163, 8
    %v1169 = vlaneseq
    %v1170 = vshrl.u32 %v1169, 7
    %v1171 = vsub.s32 0, %v1170
    %v1172 = vrot.slane %v1151, %v1171
    %v1173 = vlaneseq
    %v1174 = vshrl.u32 %v1173, 7
    %v1175 = vsub.s32 1, %v1174
    %v1176 = vrot.slane %v1151, %v1175
    %v1177 = vlaneseq
    %v1178 = vshrl.u32 %v1177, 7
    %v1179 = vsub.s32 2, %v1178
    %v1180 = vrot.slane %v1151, %v1179
    %v1181 = vlaneseq
    %v1182 = vshrl.u32 %v1181, 7
    %v1183 = vsub.s32 3, %v1182
    %v1184 = vrot.slane %v1151, %v1183
    %v1189 = vsel %vm1164, %v1172, 0.0
    %v1190 = vsel %vm1165, %v1176, 0.0
    %v1191 = vsel %vm1166, %v1180, 0.0
    %v1192 = vsel %vm1167, %v1184, 0.0
    %v1193 = vld [vmem:[#allocation2] sm:$0xf]
    %v1198 = vcombine.low %v1189, %v1190
    %v1199 = vcombine.low %v1191, %v1192
    %v1201 = vunpack.c.l.s4 1966171168
    %v1202 = vunpack.c.0.s8 %v1201
    %v1203 = vlaneseq
    %v1204 = vshrl.u32 %v1203, 7
    %v1205 = vsub.s32 %v1202, %v1204
    %v1206 = vrot.slane %v1198, %v1205
    %v1208 = vunpack.c.l.s4 1966171168
    %v1209 = vunpack.c.0.s8 %v1208
    %v1210 = vlaneseq
    %v1211 = vshrl.u32 %v1210, 7
    %v1212 = vsub.s32 %v1209, %v1211
    %v1213 = vrot.slane %v1199, %v1212
    %v1214 = vcombine.low %v1206, %v1213
    %v1216 = vunpack.c.l.s4 1966171168
    %v1217 = vunpack.c.0.s8 %v1216
    %v1218 = vlaneseq
    %v1219 = vshrl.u32 %v1218, 7
    %v1220 = vsub.s32 %v1217, %v1219
    %v1221 = vrot.slane %v1214, %v1220
    %v1223 = vadd.f32 %v1193, %v1221
    %v1224 = vlaneseq
    %vm1225 = vcmp.ge.s32.totalorder %v1224, 0
    %vm1226 = vcmp.lt.s32.totalorder %v1224, 512
    %vm1227 = vmand %vm1225, %vm1226
    %1228 = vst.msk [vmem:[#allocation2] sm:$0xf] %vm1227, %v1223
    // Predicated region
    $region150: #{tpu_custom_call.1} parent=1 // pred_check
      %p1229 = pneg %p938
    $region151: #{tpu_custom_call.1} parent=1 // pred_check_branch
      %1231 = sbr.rel (%p1229) target = $region153
    $region152: #{tpu_custom_call.1} parent=1 // pred_region
      %v1232 = vld [vmem:[#allocation2] sm:$0xf]
      %v1234 = vlaneseq
      %v1235 = vshrl.u32 %v1234, 7
      %v1236 = vsub.s32 0, %v1235
      %v1237 = vrot.slane %v1232, %v1236
      %v1238 = vlaneseq
      %v1239 = vshrl.u32 %v1238, 7
      %v1240 = vsub.s32 1, %v1239
      %v1241 = vrot.slane %v1232, %v1240
      %v1242 = vlaneseq
      %v1243 = vshrl.u32 %v1242, 7
      %v1244 = vsub.s32 2, %v1243
      %v1245 = vrot.slane %v1232, %v1244
      %v1246 = vlaneseq
      %v1247 = vshrl.u32 %v1246, 7
      %v1248 = vsub.s32 3, %v1247
      %v1249 = vrot.slane %v1232, %v1248
      %vm1254 = vcmask 1040384
      %v1255 = vsel %vm1254, %v1237, 0.0
      %v1256 = vsel %vm1254, %v1241, 0.0
      %v1257 = vadd.f32 %v1255, %v1256
      %v1258 = vsel %vm1254, %v1245, 0.0
      %v1259 = vadd.f32 %v1257, %v1258
      %v1260 = vsel %vm1254, %v1249, 0.0
      %v1261 = vadd.f32 %v1259, %v1260
      %1262 = vadd.xlane.f32.xlu0 %v1261
      %v1263 = vpop.xlane.xlu0 %1262
      %v1264 = vrot.slane %v1263, 4
      %v1265 = vadd.f32 %v1263, %v1264
      %v1266 = vrot.slane %v1265, 2
      %v1267 = vadd.f32 %v1265, %v1266
      %v1268 = vrot.slane %v1267, 1
      %v1269 = vadd.f32 %v1267, %v1268
      %s1270 = vtos %v1269
      %v1271 = vstv %s1270
      %1272 = vst [vmem:[#allocation5] sm:$0xff] %v1271
    $region153: #{tpu_custom_call.1} parent=1 // pred_fallthru
      _
    // Predicated region
    $region154: #{tpu_custom_call.1} parent=1 // pred_check
      _
    $region155: #{tpu_custom_call.1} parent=1 // pred_check_branch
      %1274 = sbr.rel (0) target = $region157
    $region156: #{tpu_custom_call.1} parent=1 // pred_region
      %s1276 = ssub.s32 128, 128
      %1277 = vsyncadd [#allocation6], %s1276
      %s1279 = sshll.u32 [#allocation5], 4
      %s1280 = int_to_ptr.vmem [resolvable:$true] %s1279
      %1282 = dma.vmem_to_hbm [thread:$0]  %s1280, 128, %s3, [#allocation6]
    $region157: #{tpu_custom_call.1} parent=1 // pred_fallthru
      _
    // Predicated region
    $region158: #{tpu_custom_call.1} parent=1 // pred_check
      _
    $region159: #{tpu_custom_call.1} parent=1 // pred_check_branch
      %1284 = sbr.rel (0) target = $region161
    $region160: #{tpu_custom_call.1} parent=1 // pred_region
      %1285 = dma.done [#allocation6], 128
    $region161: #{tpu_custom_call.1} parent=1 // pred_fallthru
      _
    %1286 = vsyncpa [#allocation6], 1

</llo_original>
